<compile_context>
chip_gen: v7x
topology: tpu7x:2x2x1
jax: 0.10.0
libtpu: 0.0.40
codegen_flags: <defaults>
</compile_context>

<pallas_src>
import math

import jax
import jax.numpy as jnp
from jax import lax
from jax.experimental import pallas as pl
from jax.experimental.pallas import tpu as pltpu


def _round_up(x, m):
    return (x + m - 1) // m * m


def _choose_batch_block(Bp):
    """Split the (padded) batch into two sublane-aligned blocks when possible so the
    leading 'parallel' grid axis can occupy both TensorCores on v7x."""
    if Bp >= 16 and Bp % 16 == 0:
        return Bp // 2
    return Bp


def _choose_time_tiling(T, Bb, Hp, budget_bytes=24 * 1024 * 1024):
    """Return (Tp, Tc): zero-padded sequence length and in-kernel chunk length.

    For T <= 128 a single chunk covers the sequence.  Otherwise T is padded to a
    multiple of 128 and Tc is the largest 128-multiple divisor whose working set
    (double-buffered gi chunk + h history + out block) fits the VMEM budget.
    """
    if T <= 128:
        return T, T

    Tp = _round_up(T, 128)

    def chunk_bytes(tc):
        gi = 2 * tc * Bb * 3 * Hp * 4        # double-buffered input chunk
        out = 2 * tc * Bb * 4                # double-buffered output block
        hist = tc * Bb * Hp * 4              # hidden-state history scratch
        return gi + out + hist

    tc = 128                                  # 128 always divides Tp
    for cand in (512, 384, 256, 128):
        if Tp % cand == 0 and chunk_bytes(cand) <= budget_bytes:
            tc = cand
            break
    return Tp, tc


def _vmem_limit_bytes(Bb, Tc, Hp):
    gi = 2 * Tc * Bb * 3 * Hp * 4
    out = 2 * Tc * Bb * 4
    hist = Tc * Bb * Hp * 4
    w = 2 * Hp * 3 * Hp * 4
    h = Bb * Hp * 4
    est = gi + out + hist + w + h + (2 << 20)
    # >= 32 MiB (covers v5e's 16 MiB default scoped limit), capped at 64 MiB so the
    # request is legal on v7x's 64 MiB physical VMEM.
    return int(min(64 << 20, max(32 << 20, est)))


def gru_chunk_kernel(gi_ref, whh_ref, bhh_n_ref, wfc_ref, bfc_ref,
                     out_ref, h_ref, hist_ref):
    """Runs Tc GRU steps for one (batch block, time chunk) grid point.

    gi_ref   : (Tc, Bb, 3*Hp) precomputed input projections, gates at 128-aligned
               offsets [r | z | n]; r/z already include b_ih + b_hh, n only b_ih.
    whh_ref  : (Hp, 3*Hp)     fused hidden-to-hidden weights (transposed, padded)
    bhh_n_ref: (1, Hp)        hidden bias of the n gate (stays inside r*(...))
    wfc_ref  : (1, Hp)        fc weight row (padded)
    bfc_ref  : (1, 1) SMEM    fc bias scalar
    out_ref  : (1, Tc, Bb)    accident scores for this chunk (t-major block)
    h_ref    : (Bb, Hp) VMEM  hidden state carried across time chunks
    hist_ref : (Tc, Bb, Hp)   per-step hidden states for this chunk
    """
    @pl.when(pl.program_id(1) == 0)        # first time chunk of this batch block
    def _init():
        h_ref[...] = jnp.zeros_like(h_ref)

    tc = gi_ref.shape[0]
    hp = whh_ref.shape[0]

    whh = whh_ref[...]                      # hoisted out of the loop
    b_n = bhh_n_ref[...]                    # (1, Hp)
    mm_dtype = whh.dtype

    def step(i, h):
        gi_t = gi_ref[i]                                        # (Bb, 3Hp) leading-axis load
        # Single fused MXU pass for all three gates.
        gh = jnp.dot(h.astype(mm_dtype), whh,
                     preferred_element_type=jnp.float32)         # (Bb, 3Hp)
        r = jax.nn.sigmoid(gi_t[:, 0:hp] + gh[:, 0:hp])
        z = jax.nn.sigmoid(gi_t[:, hp:2 * hp] + gh[:, hp:2 * hp])
        n = jnp.tanh(gi_t[:, 2 * hp:] + r * (gh[:, 2 * hp:] + b_n))
        h_new = (1.0 - z) * n + z * h
        hist_ref[i] = h_new                                      # leading-axis store
        return h_new

    h_last = lax.fori_loop(0, tc, step, h_ref[...], unroll=min(8, tc))
    h_ref[...] = h_last

    # Hoisted fc head: one vectorized multiply + lane reduce + sigmoid per chunk.
    w_fc = wfc_ref[...]                                          # (1, Hp)
    b_fc = bfc_ref[0, 0]                                         # SMEM scalar
    h_all = hist_ref[...]                                        # (Tc, Bb, Hp)
    s_tb = jax.nn.sigmoid(jnp.sum(h_all * w_fc, axis=-1) + b_fc)  # (Tc, Bb)
    out_ref[0] = s_tb.astype(out_ref.dtype)


def accident_predictor_gru(x_btd, params, *, use_bf16_matmul=False):
    """x_btd: (B, T, D) float32 -> accident scores (B, T) float32."""
    B, T, D = x_btd.shape
    wih, whh = params["wih"], params["whh"]      # (3H, D), (3H, H) PyTorch layout r|z|n
    bih, bhh = params["bih"], params["bhh"]      # (3H,), (3H,)
    wfc, bfc = params["wfc"], params["bfc"]      # (1, H), (1,)
    H = whh.shape[1]

    f32 = jnp.float32
    Hp = _round_up(H, 128)                       # lane-aligned gate width
    Bp = _round_up(B, 8)                         # f32 sublane alignment
    Bb = _choose_batch_block(Bp)
    Tp, Tc = _choose_time_tiling(T, Bb, Hp)
    nb, nc = Bp // Bb, Tp // Tc

    # ---- Gate-blocked, 128-lane-padded parameter layout --------------------------
    wih_pad = jnp.zeros((3 * Hp, D), f32)
    whh_pad = jnp.zeros((Hp, 3 * Hp), f32)
    bias_pad = jnp.zeros((3 * Hp,), f32)
    for g in range(3):
        rows = slice(g * H, (g + 1) * H)
        wih_pad = wih_pad.at[g * Hp:g * Hp + H].set(wih[rows])
        whh_pad = whh_pad.at[:H, g * Hp:g * Hp + H].set(whh[rows].T)
        # r/z gates: pre-sum b_ih + b_hh (folded into the gi GEMM epilogue below).
        # n gate: only b_ih here; b_hh_n must stay inside r*(gh_n + b_hh_n).
        b = bih[rows] + (bhh[rows] if g < 2 else 0.0)
        bias_pad = bias_pad.at[g * Hp:g * Hp + H].set(b)
    bhh_n_pad = jnp.zeros((1, Hp), f32).at[0, :H].set(bhh[2 * H:3 * H])
    wfc_pad = jnp.zeros((1, Hp), f32).at[0, :H].set(wfc[0])
    bfc_11 = bfc.reshape(1, 1).astype(f32)
    if use_bf16_matmul:
        # v6e/v7x fast path; loosens bit-tolerance vs. the f32 reference.
        whh_pad = whh_pad.astype(jnp.bfloat16)

    # ---- Hoisted time-invariant input projection: ONE MXU-friendly GEMM ----------
    # Laid out t-major (Tp, Bp, 3Hp) so the kernel indexes time on the leading
    # (cheap address-offset) axis of both gi and the hidden-history scratch.
    x_tbd = jnp.transpose(x_btd.astype(f32), (1, 0, 2))            # (T, B, D)
    x_pad = jnp.zeros((Tp, Bp, D), f32).at[:T, :B].set(x_tbd)
    gi = (jnp.dot(x_pad.reshape(Tp * Bp, D), wih_pad.T,
                  preferred_element_type=f32) + bias_pad)          # bias fused by XLA
    gi = gi.reshape(Tp, Bp, 3 * Hp)

    out = pl.pallas_call(
        gru_chunk_kernel,
        out_shape=jax.ShapeDtypeStruct((nb, Tp, Bb), f32),
        grid_spec=pltpu.PrefetchScalarGridSpec(
            num_scalar_prefetch=0,
            grid=(nb, nc),                              # batch blocks x time chunks
            in_specs=[
                pl.BlockSpec((Tc, Bb, 3 * Hp), lambda b, c: (c, b, 0)),   # gi chunk
                pl.BlockSpec((Hp, 3 * Hp), lambda b, c: (0, 0)),          # W_hh fused
                pl.BlockSpec((1, Hp), lambda b, c: (0, 0)),               # b_hh_n
                pl.BlockSpec((1, Hp), lambda b, c: (0, 0)),               # fc weight
                pl.BlockSpec(memory_space=pltpu.MemorySpace.SMEM),        # fc bias
            ],
            out_specs=pl.BlockSpec((1, Tc, Bb), lambda b, c: (b, c, 0)),
            scratch_shapes=[
                pltpu.VMEM((Bb, Hp), jnp.float32),       # hidden-state carry
                pltpu.VMEM((Tc, Bb, Hp), jnp.float32),   # per-chunk hidden history
            ],
        ),
        compiler_params=pltpu.CompilerParams(
            dimension_semantics=("parallel", "arbitrary"),   # batch || , time serial
            vmem_limit_bytes=_vmem_limit_bytes(Bb, Tc, Hp),
        ),
    )(gi, whh_pad, bhh_n_pad, wfc_pad, bfc_11)

    # (nb, Tp, Bb) -> (B, T). The scores tensor is ~Hp x smaller than the gi stream,
    # so this wrapper-side transpose is negligible HBM traffic.
    scores = jnp.transpose(out, (0, 2, 1)).reshape(Bp, Tp)
    return scores[:B, :T]


def init_params(key, feature_dim, hidden_dim):
    """Deterministic PyTorch-style init (uniform(-1/sqrt(H), 1/sqrt(H)))."""
    ks = jax.random.split(key, 6)
    k_gru = 1.0 / math.sqrt(hidden_dim)
    k_fc = 1.0 / math.sqrt(hidden_dim)
    wih = jax.random.uniform(ks[0], (3 * hidden_dim, feature_dim),
                             jnp.float32, -k_gru, k_gru)
    whh = jax.random.uniform(ks[1], (3 * hidden_dim, hidden_dim),
                             jnp.float32, -k_gru, k_gru)
    bih = jax.random.uniform(ks[2], (3 * hidden_dim,), jnp.float32, -k_gru, k_gru)
    bhh = jax.random.uniform(ks[3], (3 * hidden_dim,), jnp.float32, -k_gru, k_gru)
    wfc = jax.random.uniform(ks[4], (1, hidden_dim), jnp.float32, -k_fc, k_fc)
    bfc = jax.random.uniform(ks[5], (1,), jnp.float32, -k_fc, k_fc)
    return {"wih": wih, "whh": whh, "bih": bih, "bhh": bhh, "wfc": wfc, "bfc": bfc}


def reference_forward(x_btd, params):
    """Pure-JAX GRU + fc reference (PyTorch GRU equations)."""
    B, T, D = x_btd.shape
    H = params["whh"].shape[1]
    wih_T, whh_T = params["wih"].T, params["whh"].T
    bih, bhh = params["bih"], params["bhh"]
    wfc, bfc = params["wfc"].T, params["bfc"][0]
    x_tbd = jnp.transpose(x_btd, (1, 0, 2))

    def step(h, x_t):
        gi = x_t @ wih_T + bih
        gh = h @ whh_T + bhh
        r = jax.nn.sigmoid(gi[:, :H] + gh[:, :H])
        z = jax.nn.sigmoid(gi[:, H:2 * H] + gh[:, H:2 * H])
        n = jnp.tanh(gi[:, 2 * H:] + r * gh[:, 2 * H:])
        h_new = (1.0 - z) * n + z * h
        score = jax.nn.sigmoid(h_new @ wfc + bfc)[:, 0]
        return h_new, score

    h0 = jnp.zeros((B, H), jnp.float32)
    _, scores_tb = lax.scan(step, h0, x_tbd)
    return scores_tb.T   # (B, T)


if __name__ == "__main__":
    B, T, D, H = 2, 8, 16, 32
    key = jax.random.PRNGKey(0)
    k_x, k_p = jax.random.split(key)
    x = jax.random.normal(k_x, (B, T, D), jnp.float32)
    params = init_params(k_p, D, H)

    out = jax.block_until_ready(accident_predictor_gru(x, params))
    ref = jax.block_until_ready(reference_forward(x, params))

    assert out.shape == (B, T)
    assert jnp.allclose(out, ref, atol=3e-5, rtol=3e-5), (out, ref)
    print("KERNEL_OK")
</pallas_src>

<mosaic_0001>
module attributes {stable_mosaic.version = 11 : i64} {
  func.func @gru_chunk_kernel(%arg0: i32, %arg1: i32, %arg2: memref<8x8x384xf32, #tpu.memory_space<vmem>>, %arg3: memref<128x384xf32, #tpu.memory_space<vmem>>, %arg4: memref<1x128xf32, #tpu.memory_space<vmem>>, %arg5: memref<1x128xf32, #tpu.memory_space<vmem>>, %arg6: memref<1x1xf32, #tpu.memory_space<smem>>, %arg7: memref<1x8x8xf32, #tpu.memory_space<vmem>>, %arg8: memref<8x128xf32, #tpu.memory_space<vmem>>, %arg9: memref<8x8x128xf32, #tpu.memory_space<vmem>>) attributes {dimension_semantics = [#tpu.dimension_semantics<parallel>, #tpu.dimension_semantics<arbitrary>], iteration_bounds = array<i64: 1, 1>, scalar_prefetch = 0 : i64, scratch_operands = 2 : i64, tpu.core_type = #tpu.core_type<tc>, window_params = [{transform_indices = @transform_0, window_bounds = array<i64: 8, 8, 384>}, {pipeline_mode = #tpu.pipeline_mode<synchronous>, transform_indices = @transform_1, window_bounds = array<i64: 128, 384>}, {pipeline_mode = #tpu.pipeline_mode<synchronous>, transform_indices = @transform_2, window_bounds = array<i64: 1, 128>}, {pipeline_mode = #tpu.pipeline_mode<synchronous>, transform_indices = @transform_3, window_bounds = array<i64: 1, 128>}, {transform_indices = @transform_4, window_bounds = array<i64: 1, 1>}, {transform_indices = @transform_5, window_bounds = array<i64: 1, 8, 8>}]} {
    %c0_i32 = arith.constant 0 : i32
    %0 = arith.cmpi eq, %arg1, %c0_i32 : i32
    %1 = arith.extui %0 : i1 to i32
    %c0_i32_0 = arith.constant 0 : i32
    %2 = arith.cmpi ne, %1, %c0_i32_0 : i32
    scf.if %2 {
      %cst_84 = arith.constant 0.000000e+00 : f32
      %312 = vector.broadcast %cst_84 : f32 to vector<8x128xf32>
      %c0_85 = arith.constant 0 : index
      %c0_86 = arith.constant 0 : index
      %313 = vector.load %arg8[%c0_85, %c0_86] : memref<8x128xf32, #tpu.memory_space<vmem>>, vector<8x128xf32>
      tpu.vector_store %arg8[%c0_85, %c0_86], %312 {strides = array<i32>} : memref<8x128xf32, #tpu.memory_space<vmem>>, vector<8x128xf32>,
    } else {
    }
    %c0 = arith.constant 0 : index
    %c0_1 = arith.constant 0 : index
    %3 = vector.load %arg3[%c0, %c0_1] : memref<128x384xf32, #tpu.memory_space<vmem>>, vector<128x384xf32>
    %c0_2 = arith.constant 0 : index
    %c0_3 = arith.constant 0 : index
    %4 = vector.load %arg4[%c0_2, %c0_3] : memref<1x128xf32, #tpu.memory_space<vmem>>, vector<1x128xf32>
    %c0_4 = arith.constant 0 : index
    %c0_5 = arith.constant 0 : index
    %5 = vector.load %arg8[%c0_4, %c0_5] : memref<8x128xf32, #tpu.memory_space<vmem>>, vector<8x128xf32>
    %c0_i32_6 = arith.constant 0 : i32
    %6 = arith.index_cast %c0_i32_6 : i32 to index
    %c0_7 = arith.constant 0 : index
    %c0_8 = arith.constant 0 : index
    %7 = vector.load %arg2[%6, %c0_7, %c0_8] : memref<8x8x384xf32, #tpu.memory_space<vmem>>, vector<1x8x384xf32>
    %8 = vector.shape_cast %7 : vector<1x8x384xf32> to vector<8x384xf32>
    %cst = arith.constant dense<0.000000e+00> : vector<8x384xf32>
    %9 = tpu.matmul %5, %3, %cst {dimension_numbers = #tpu.dot_dimension_numbers<[1], [0], [0], [1], [0, 0, 1, 1], [], []>} : vector<8x128xf32>, vector<128x384xf32>, vector<8x384xf32> -> vector<8x384xf32>
    %10 = vector.extract_strided_slice %8 {offsets = [0, 0], sizes = [8, 128], strides = [1, 1]} : vector<8x384xf32> to vector<8x128xf32>
    %11 = vector.extract_strided_slice %9 {offsets = [0, 0], sizes = [8, 128], strides = [1, 1]} : vector<8x384xf32> to vector<8x128xf32>
    %12 = arith.addf %10, %11 : vector<8x128xf32>
    %13 = arith.negf %12 : vector<8x128xf32>
    %14 = math.exp %13 : vector<8x128xf32>
    %cst_9 = arith.constant 1.000000e+00 : f32
    %15 = vector.broadcast %cst_9 : f32 to vector<8x128xf32>
    %16 = arith.addf %15, %14 : vector<8x128xf32>
    %17 = arith.divf %15, %16 : vector<8x128xf32>
    %18 = vector.extract_strided_slice %8 {offsets = [0, 128], sizes = [8, 128], strides = [1, 1]} : vector<8x384xf32> to vector<8x128xf32>
    %19 = vector.extract_strided_slice %9 {offsets = [0, 128], sizes = [8, 128], strides = [1, 1]} : vector<8x384xf32> to vector<8x128xf32>
    %20 = arith.addf %18, %19 : vector<8x128xf32>
    %21 = arith.negf %20 : vector<8x128xf32>
    %22 = math.exp %21 : vector<8x128xf32>
    %cst_10 = arith.constant 1.000000e+00 : f32
    %23 = vector.broadcast %cst_10 : f32 to vector<8x128xf32>
    %24 = arith.addf %23, %22 : vector<8x128xf32>
    %25 = arith.divf %23, %24 : vector<8x128xf32>
    %26 = vector.extract_strided_slice %8 {offsets = [0, 256], sizes = [8, 128], strides = [1, 1]} : vector<8x384xf32> to vector<8x128xf32>
    %27 = vector.extract_strided_slice %9 {offsets = [0, 256], sizes = [8, 128], strides = [1, 1]} : vector<8x384xf32> to vector<8x128xf32>
    %28 = vector.broadcast %4 : vector<1x128xf32> to vector<8x128xf32>
    %29 = arith.addf %27, %28 : vector<8x128xf32>
    %30 = arith.mulf %17, %29 : vector<8x128xf32>
    %31 = arith.addf %26, %30 : vector<8x128xf32>
    %32 = math.tanh %31 : vector<8x128xf32>
    %cst_11 = arith.constant 1.000000e+00 : f32
    %33 = vector.broadcast %cst_11 : f32 to vector<8x128xf32>
    %34 = arith.subf %33, %25 : vector<8x128xf32>
    %35 = arith.mulf %34, %32 : vector<8x128xf32>
    %36 = arith.mulf %25, %5 : vector<8x128xf32>
    %37 = arith.addf %35, %36 : vector<8x128xf32>
    %38 = arith.index_cast %c0_i32_6 : i32 to index
    %c0_12 = arith.constant 0 : index
    %c0_13 = arith.constant 0 : index
    %39 = vector.load %arg9[%38, %c0_12, %c0_13] : memref<8x8x128xf32, #tpu.memory_space<vmem>>, vector<1x8x128xf32>
    %40 = vector.shape_cast %39 : vector<1x8x128xf32> to vector<8x128xf32>
    %41 = vector.shape_cast %37 : vector<8x128xf32> to vector<1x8x128xf32>
    tpu.vector_store %arg9[%38, %c0_12, %c0_13], %41 {strides = array<i32>} : memref<8x8x128xf32, #tpu.memory_space<vmem>>, vector<1x8x128xf32>,
    %c1_i32 = arith.constant 1 : i32
    %42 = arith.index_cast %c1_i32 : i32 to index
    %c0_14 = arith.constant 0 : index
    %c0_15 = arith.constant 0 : index
    %43 = vector.load %arg2[%42, %c0_14, %c0_15] : memref<8x8x384xf32, #tpu.memory_space<vmem>>, vector<1x8x384xf32>
    %44 = vector.shape_cast %43 : vector<1x8x384xf32> to vector<8x384xf32>
    %cst_16 = arith.constant dense<0.000000e+00> : vector<8x384xf32>
    %45 = tpu.matmul %37, %3, %cst_16 {dimension_numbers = #tpu.dot_dimension_numbers<[1], [0], [0], [1], [0, 0, 1, 1], [], []>} : vector<8x128xf32>, vector<128x384xf32>, vector<8x384xf32> -> vector<8x384xf32>
    %46 = vector.extract_strided_slice %44 {offsets = [0, 0], sizes = [8, 128], strides = [1, 1]} : vector<8x384xf32> to vector<8x128xf32>
    %47 = vector.extract_strided_slice %45 {offsets = [0, 0], sizes = [8, 128], strides = [1, 1]} : vector<8x384xf32> to vector<8x128xf32>
    %48 = arith.addf %46, %47 : vector<8x128xf32>
    %49 = arith.negf %48 : vector<8x128xf32>
    %50 = math.exp %49 : vector<8x128xf32>
    %cst_17 = arith.constant 1.000000e+00 : f32
    %51 = vector.broadcast %cst_17 : f32 to vector<8x128xf32>
    %52 = arith.addf %51, %50 : vector<8x128xf32>
    %53 = arith.divf %51, %52 : vector<8x128xf32>
    %54 = vector.extract_strided_slice %44 {offsets = [0, 128], sizes = [8, 128], strides = [1, 1]} : vector<8x384xf32> to vector<8x128xf32>
    %55 = vector.extract_strided_slice %45 {offsets = [0, 128], sizes = [8, 128], strides = [1, 1]} : vector<8x384xf32> to vector<8x128xf32>
    %56 = arith.addf %54, %55 : vector<8x128xf32>
    %57 = arith.negf %56 : vector<8x128xf32>
    %58 = math.exp %57 : vector<8x128xf32>
    %cst_18 = arith.constant 1.000000e+00 : f32
    %59 = vector.broadcast %cst_18 : f32 to vector<8x128xf32>
    %60 = arith.addf %59, %58 : vector<8x128xf32>
    %61 = arith.divf %59, %60 : vector<8x128xf32>
    %62 = vector.extract_strided_slice %44 {offsets = [0, 256], sizes = [8, 128], strides = [1, 1]} : vector<8x384xf32> to vector<8x128xf32>
    %63 = vector.extract_strided_slice %45 {offsets = [0, 256], sizes = [8, 128], strides = [1, 1]} : vector<8x384xf32> to vector<8x128xf32>
    %64 = vector.broadcast %4 : vector<1x128xf32> to vector<8x128xf32>
    %65 = arith.addf %63, %64 : vector<8x128xf32>
    %66 = arith.mulf %53, %65 : vector<8x128xf32>
    %67 = arith.addf %62, %66 : vector<8x128xf32>
    %68 = math.tanh %67 : vector<8x128xf32>
    %cst_19 = arith.constant 1.000000e+00 : f32
    %69 = vector.broadcast %cst_19 : f32 to vector<8x128xf32>
    %70 = arith.subf %69, %61 : vector<8x128xf32>
    %71 = arith.mulf %70, %68 : vector<8x128xf32>
    %72 = arith.mulf %61, %37 : vector<8x128xf32>
    %73 = arith.addf %71, %72 : vector<8x128xf32>
    %74 = arith.index_cast %c1_i32 : i32 to index
    %c0_20 = arith.constant 0 : index
    %c0_21 = arith.constant 0 : index
    %75 = vector.load %arg9[%74, %c0_20, %c0_21] : memref<8x8x128xf32, #tpu.memory_space<vmem>>, vector<1x8x128xf32>
    %76 = vector.shape_cast %75 : vector<1x8x128xf32> to vector<8x128xf32>
    %77 = vector.shape_cast %73 : vector<8x128xf32> to vector<1x8x128xf32>
    tpu.vector_store %arg9[%74, %c0_20, %c0_21], %77 {strides = array<i32>} : memref<8x8x128xf32, #tpu.memory_space<vmem>>, vector<1x8x128xf32>,
    %c2_i32 = arith.constant 2 : i32
    %78 = arith.index_cast %c2_i32 : i32 to index
    %c0_22 = arith.constant 0 : index
    %c0_23 = arith.constant 0 : index
    %79 = vector.load %arg2[%78, %c0_22, %c0_23] : memref<8x8x384xf32, #tpu.memory_space<vmem>>, vector<1x8x384xf32>
    %80 = vector.shape_cast %79 : vector<1x8x384xf32> to vector<8x384xf32>
    %cst_24 = arith.constant dense<0.000000e+00> : vector<8x384xf32>
    %81 = tpu.matmul %73, %3, %cst_24 {dimension_numbers = #tpu.dot_dimension_numbers<[1], [0], [0], [1], [0, 0, 1, 1], [], []>} : vector<8x128xf32>, vector<128x384xf32>, vector<8x384xf32> -> vector<8x384xf32>
    %82 = vector.extract_strided_slice %80 {offsets = [0, 0], sizes = [8, 128], strides = [1, 1]} : vector<8x384xf32> to vector<8x128xf32>
    %83 = vector.extract_strided_slice %81 {offsets = [0, 0], sizes = [8, 128], strides = [1, 1]} : vector<8x384xf32> to vector<8x128xf32>
    %84 = arith.addf %82, %83 : vector<8x128xf32>
    %85 = arith.negf %84 : vector<8x128xf32>
    %86 = math.exp %85 : vector<8x128xf32>
    %cst_25 = arith.constant 1.000000e+00 : f32
    %87 = vector.broadcast %cst_25 : f32 to vector<8x128xf32>
    %88 = arith.addf %87, %86 : vector<8x128xf32>
    %89 = arith.divf %87, %88 : vector<8x128xf32>
    %90 = vector.extract_strided_slice %80 {offsets = [0, 128], sizes = [8, 128], strides = [1, 1]} : vector<8x384xf32> to vector<8x128xf32>
    %91 = vector.extract_strided_slice %81 {offsets = [0, 128], sizes = [8, 128], strides = [1, 1]} : vector<8x384xf32> to vector<8x128xf32>
    %92 = arith.addf %90, %91 : vector<8x128xf32>
    %93 = arith.negf %92 : vector<8x128xf32>
    %94 = math.exp %93 : vector<8x128xf32>
    %cst_26 = arith.constant 1.000000e+00 : f32
    %95 = vector.broadcast %cst_26 : f32 to vector<8x128xf32>
    %96 = arith.addf %95, %94 : vector<8x128xf32>
    %97 = arith.divf %95, %96 : vector<8x128xf32>
    %98 = vector.extract_strided_slice %80 {offsets = [0, 256], sizes = [8, 128], strides = [1, 1]} : vector<8x384xf32> to vector<8x128xf32>
    %99 = vector.extract_strided_slice %81 {offsets = [0, 256], sizes = [8, 128], strides = [1, 1]} : vector<8x384xf32> to vector<8x128xf32>
    %100 = vector.broadcast %4 : vector<1x128xf32> to vector<8x128xf32>
    %101 = arith.addf %99, %100 : vector<8x128xf32>
    %102 = arith.mulf %89, %101 : vector<8x128xf32>
    %103 = arith.addf %98, %102 : vector<8x128xf32>
    %104 = math.tanh %103 : vector<8x128xf32>
    %cst_27 = arith.constant 1.000000e+00 : f32
    %105 = vector.broadcast %cst_27 : f32 to vector<8x128xf32>
    %106 = arith.subf %105, %97 : vector<8x128xf32>
    %107 = arith.mulf %106, %104 : vector<8x128xf32>
    %108 = arith.mulf %97, %73 : vector<8x128xf32>
    %109 = arith.addf %107, %108 : vector<8x128xf32>
    %110 = arith.index_cast %c2_i32 : i32 to index
    %c0_28 = arith.constant 0 : index
    %c0_29 = arith.constant 0 : index
    %111 = vector.load %arg9[%110, %c0_28, %c0_29] : memref<8x8x128xf32, #tpu.memory_space<vmem>>, vector<1x8x128xf32>
    %112 = vector.shape_cast %111 : vector<1x8x128xf32> to vector<8x128xf32>
    %113 = vector.shape_cast %109 : vector<8x128xf32> to vector<1x8x128xf32>
    tpu.vector_store %arg9[%110, %c0_28, %c0_29], %113 {strides = array<i32>} : memref<8x8x128xf32, #tpu.memory_space<vmem>>, vector<1x8x128xf32>,
    %c3_i32 = arith.constant 3 : i32
    %114 = arith.index_cast %c3_i32 : i32 to index
    %c0_30 = arith.constant 0 : index
    %c0_31 = arith.constant 0 : index
    %115 = vector.load %arg2[%114, %c0_30, %c0_31] : memref<8x8x384xf32, #tpu.memory_space<vmem>>, vector<1x8x384xf32>
    %116 = vector.shape_cast %115 : vector<1x8x384xf32> to vector<8x384xf32>
    %cst_32 = arith.constant dense<0.000000e+00> : vector<8x384xf32>
    %117 = tpu.matmul %109, %3, %cst_32 {dimension_numbers = #tpu.dot_dimension_numbers<[1], [0], [0], [1], [0, 0, 1, 1], [], []>} : vector<8x128xf32>, vector<128x384xf32>, vector<8x384xf32> -> vector<8x384xf32>
    %118 = vector.extract_strided_slice %116 {offsets = [0, 0], sizes = [8, 128], strides = [1, 1]} : vector<8x384xf32> to vector<8x128xf32>
    %119 = vector.extract_strided_slice %117 {offsets = [0, 0], sizes = [8, 128], strides = [1, 1]} : vector<8x384xf32> to vector<8x128xf32>
    %120 = arith.addf %118, %119 : vector<8x128xf32>
    %121 = arith.negf %120 : vector<8x128xf32>
    %122 = math.exp %121 : vector<8x128xf32>
    %cst_33 = arith.constant 1.000000e+00 : f32
    %123 = vector.broadcast %cst_33 : f32 to vector<8x128xf32>
    %124 = arith.addf %123, %122 : vector<8x128xf32>
    %125 = arith.divf %123, %124 : vector<8x128xf32>
    %126 = vector.extract_strided_slice %116 {offsets = [0, 128], sizes = [8, 128], strides = [1, 1]} : vector<8x384xf32> to vector<8x128xf32>
    %127 = vector.extract_strided_slice %117 {offsets = [0, 128], sizes = [8, 128], strides = [1, 1]} : vector<8x384xf32> to vector<8x128xf32>
    %128 = arith.addf %126, %127 : vector<8x128xf32>
    %129 = arith.negf %128 : vector<8x128xf32>
    %130 = math.exp %129 : vector<8x128xf32>
    %cst_34 = arith.constant 1.000000e+00 : f32
    %131 = vector.broadcast %cst_34 : f32 to vector<8x128xf32>
    %132 = arith.addf %131, %130 : vector<8x128xf32>
    %133 = arith.divf %131, %132 : vector<8x128xf32>
    %134 = vector.extract_strided_slice %116 {offsets = [0, 256], sizes = [8, 128], strides = [1, 1]} : vector<8x384xf32> to vector<8x128xf32>
    %135 = vector.extract_strided_slice %117 {offsets = [0, 256], sizes = [8, 128], strides = [1, 1]} : vector<8x384xf32> to vector<8x128xf32>
    %136 = vector.broadcast %4 : vector<1x128xf32> to vector<8x128xf32>
    %137 = arith.addf %135, %136 : vector<8x128xf32>
    %138 = arith.mulf %125, %137 : vector<8x128xf32>
    %139 = arith.addf %134, %138 : vector<8x128xf32>
    %140 = math.tanh %139 : vector<8x128xf32>
    %cst_35 = arith.constant 1.000000e+00 : f32
    %141 = vector.broadcast %cst_35 : f32 to vector<8x128xf32>
    %142 = arith.subf %141, %133 : vector<8x128xf32>
    %143 = arith.mulf %142, %140 : vector<8x128xf32>
    %144 = arith.mulf %133, %109 : vector<8x128xf32>
    %145 = arith.addf %143, %144 : vector<8x128xf32>
    %146 = arith.index_cast %c3_i32 : i32 to index
    %c0_36 = arith.constant 0 : index
    %c0_37 = arith.constant 0 : index
    %147 = vector.load %arg9[%146, %c0_36, %c0_37] : memref<8x8x128xf32, #tpu.memory_space<vmem>>, vector<1x8x128xf32>
    %148 = vector.shape_cast %147 : vector<1x8x128xf32> to vector<8x128xf32>
    %149 = vector.shape_cast %145 : vector<8x128xf32> to vector<1x8x128xf32>
    tpu.vector_store %arg9[%146, %c0_36, %c0_37], %149 {strides = array<i32>} : memref<8x8x128xf32, #tpu.memory_space<vmem>>, vector<1x8x128xf32>,
    %c4_i32 = arith.constant 4 : i32
    %150 = arith.index_cast %c4_i32 : i32 to index
    %c0_38 = arith.constant 0 : index
    %c0_39 = arith.constant 0 : index
    %151 = vector.load %arg2[%150, %c0_38, %c0_39] : memref<8x8x384xf32, #tpu.memory_space<vmem>>, vector<1x8x384xf32>
    %152 = vector.shape_cast %151 : vector<1x8x384xf32> to vector<8x384xf32>
    %cst_40 = arith.constant dense<0.000000e+00> : vector<8x384xf32>
    %153 = tpu.matmul %145, %3, %cst_40 {dimension_numbers = #tpu.dot_dimension_numbers<[1], [0], [0], [1], [0, 0, 1, 1], [], []>} : vector<8x128xf32>, vector<128x384xf32>, vector<8x384xf32> -> vector<8x384xf32>
    %154 = vector.extract_strided_slice %152 {offsets = [0, 0], sizes = [8, 128], strides = [1, 1]} : vector<8x384xf32> to vector<8x128xf32>
    %155 = vector.extract_strided_slice %153 {offsets = [0, 0], sizes = [8, 128], strides = [1, 1]} : vector<8x384xf32> to vector<8x128xf32>
    %156 = arith.addf %154, %155 : vector<8x128xf32>
    %157 = arith.negf %156 : vector<8x128xf32>
    %158 = math.exp %157 : vector<8x128xf32>
    %cst_41 = arith.constant 1.000000e+00 : f32
    %159 = vector.broadcast %cst_41 : f32 to vector<8x128xf32>
    %160 = arith.addf %159, %158 : vector<8x128xf32>
    %161 = arith.divf %159, %160 : vector<8x128xf32>
    %162 = vector.extract_strided_slice %152 {offsets = [0, 128], sizes = [8, 128], strides = [1, 1]} : vector<8x384xf32> to vector<8x128xf32>
    %163 = vector.extract_strided_slice %153 {offsets = [0, 128], sizes = [8, 128], strides = [1, 1]} : vector<8x384xf32> to vector<8x128xf32>
    %164 = arith.addf %162, %163 : vector<8x128xf32>
    %165 = arith.negf %164 : vector<8x128xf32>
    %166 = math.exp %165 : vector<8x128xf32>
    %cst_42 = arith.constant 1.000000e+00 : f32
    %167 = vector.broadcast %cst_42 : f32 to vector<8x128xf32>
    %168 = arith.addf %167, %166 : vector<8x128xf32>
    %169 = arith.divf %167, %168 : vector<8x128xf32>
    %170 = vector.extract_strided_slice %152 {offsets = [0, 256], sizes = [8, 128], strides = [1, 1]} : vector<8x384xf32> to vector<8x128xf32>
    %171 = vector.extract_strided_slice %153 {offsets = [0, 256], sizes = [8, 128], strides = [1, 1]} : vector<8x384xf32> to vector<8x128xf32>
    %172 = vector.broadcast %4 : vector<1x128xf32> to vector<8x128xf32>
    %173 = arith.addf %171, %172 : vector<8x128xf32>
    %174 = arith.mulf %161, %173 : vector<8x128xf32>
    %175 = arith.addf %170, %174 : vector<8x128xf32>
    %176 = math.tanh %175 : vector<8x128xf32>
    %cst_43 = arith.constant 1.000000e+00 : f32
    %177 = vector.broadcast %cst_43 : f32 to vector<8x128xf32>
    %178 = arith.subf %177, %169 : vector<8x128xf32>
    %179 = arith.mulf %178, %176 : vector<8x128xf32>
    %180 = arith.mulf %169, %145 : vector<8x128xf32>
    %181 = arith.addf %179, %180 : vector<8x128xf32>
    %182 = arith.index_cast %c4_i32 : i32 to index
    %c0_44 = arith.constant 0 : index
    %c0_45 = arith.constant 0 : index
    %183 = vector.load %arg9[%182, %c0_44, %c0_45] : memref<8x8x128xf32, #tpu.memory_space<vmem>>, vector<1x8x128xf32>
    %184 = vector.shape_cast %183 : vector<1x8x128xf32> to vector<8x128xf32>
    %185 = vector.shape_cast %181 : vector<8x128xf32> to vector<1x8x128xf32>
    tpu.vector_store %arg9[%182, %c0_44, %c0_45], %185 {strides = array<i32>} : memref<8x8x128xf32, #tpu.memory_space<vmem>>, vector<1x8x128xf32>,
    %c5_i32 = arith.constant 5 : i32
    %186 = arith.index_cast %c5_i32 : i32 to index
    %c0_46 = arith.constant 0 : index
    %c0_47 = arith.constant 0 : index
    %187 = vector.load %arg2[%186, %c0_46, %c0_47] : memref<8x8x384xf32, #tpu.memory_space<vmem>>, vector<1x8x384xf32>
    %188 = vector.shape_cast %187 : vector<1x8x384xf32> to vector<8x384xf32>
    %cst_48 = arith.constant dense<0.000000e+00> : vector<8x384xf32>
    %189 = tpu.matmul %181, %3, %cst_48 {dimension_numbers = #tpu.dot_dimension_numbers<[1], [0], [0], [1], [0, 0, 1, 1], [], []>} : vector<8x128xf32>, vector<128x384xf32>, vector<8x384xf32> -> vector<8x384xf32>
    %190 = vector.extract_strided_slice %188 {offsets = [0, 0], sizes = [8, 128], strides = [1, 1]} : vector<8x384xf32> to vector<8x128xf32>
    %191 = vector.extract_strided_slice %189 {offsets = [0, 0], sizes = [8, 128], strides = [1, 1]} : vector<8x384xf32> to vector<8x128xf32>
    %192 = arith.addf %190, %191 : vector<8x128xf32>
    %193 = arith.negf %192 : vector<8x128xf32>
    %194 = math.exp %193 : vector<8x128xf32>
    %cst_49 = arith.constant 1.000000e+00 : f32
    %195 = vector.broadcast %cst_49 : f32 to vector<8x128xf32>
    %196 = arith.addf %195, %194 : vector<8x128xf32>
    %197 = arith.divf %195, %196 : vector<8x128xf32>
    %198 = vector.extract_strided_slice %188 {offsets = [0, 128], sizes = [8, 128], strides = [1, 1]} : vector<8x384xf32> to vector<8x128xf32>
    %199 = vector.extract_strided_slice %189 {offsets = [0, 128], sizes = [8, 128], strides = [1, 1]} : vector<8x384xf32> to vector<8x128xf32>
    %200 = arith.addf %198, %199 : vector<8x128xf32>
    %201 = arith.negf %200 : vector<8x128xf32>
    %202 = math.exp %201 : vector<8x128xf32>
    %cst_50 = arith.constant 1.000000e+00 : f32
    %203 = vector.broadcast %cst_50 : f32 to vector<8x128xf32>
    %204 = arith.addf %203, %202 : vector<8x128xf32>
    %205 = arith.divf %203, %204 : vector<8x128xf32>
    %206 = vector.extract_strided_slice %188 {offsets = [0, 256], sizes = [8, 128], strides = [1, 1]} : vector<8x384xf32> to vector<8x128xf32>
    %207 = vector.extract_strided_slice %189 {offsets = [0, 256], sizes = [8, 128], strides = [1, 1]} : vector<8x384xf32> to vector<8x128xf32>
    %208 = vector.broadcast %4 : vector<1x128xf32> to vector<8x128xf32>
    %209 = arith.addf %207, %208 : vector<8x128xf32>
    %210 = arith.mulf %197, %209 : vector<8x128xf32>
    %211 = arith.addf %206, %210 : vector<8x128xf32>
    %212 = math.tanh %211 : vector<8x128xf32>
    %cst_51 = arith.constant 1.000000e+00 : f32
    %213 = vector.broadcast %cst_51 : f32 to vector<8x128xf32>
    %214 = arith.subf %213, %205 : vector<8x128xf32>
    %215 = arith.mulf %214, %212 : vector<8x128xf32>
    %216 = arith.mulf %205, %181 : vector<8x128xf32>
    %217 = arith.addf %215, %216 : vector<8x128xf32>
    %218 = arith.index_cast %c5_i32 : i32 to index
    %c0_52 = arith.constant 0 : index
    %c0_53 = arith.constant 0 : index
    %219 = vector.load %arg9[%218, %c0_52, %c0_53] : memref<8x8x128xf32, #tpu.memory_space<vmem>>, vector<1x8x128xf32>
    %220 = vector.shape_cast %219 : vector<1x8x128xf32> to vector<8x128xf32>
    %221 = vector.shape_cast %217 : vector<8x128xf32> to vector<1x8x128xf32>
    tpu.vector_store %arg9[%218, %c0_52, %c0_53], %221 {strides = array<i32>} : memref<8x8x128xf32, #tpu.memory_space<vmem>>, vector<1x8x128xf32>,
    %c6_i32 = arith.constant 6 : i32
    %222 = arith.index_cast %c6_i32 : i32 to index
    %c0_54 = arith.constant 0 : index
    %c0_55 = arith.constant 0 : index
    %223 = vector.load %arg2[%222, %c0_54, %c0_55] : memref<8x8x384xf32, #tpu.memory_space<vmem>>, vector<1x8x384xf32>
    %224 = vector.shape_cast %223 : vector<1x8x384xf32> to vector<8x384xf32>
    %cst_56 = arith.constant dense<0.000000e+00> : vector<8x384xf32>
    %225 = tpu.matmul %217, %3, %cst_56 {dimension_numbers = #tpu.dot_dimension_numbers<[1], [0], [0], [1], [0, 0, 1, 1], [], []>} : vector<8x128xf32>, vector<128x384xf32>, vector<8x384xf32> -> vector<8x384xf32>
    %226 = vector.extract_strided_slice %224 {offsets = [0, 0], sizes = [8, 128], strides = [1, 1]} : vector<8x384xf32> to vector<8x128xf32>
    %227 = vector.extract_strided_slice %225 {offsets = [0, 0], sizes = [8, 128], strides = [1, 1]} : vector<8x384xf32> to vector<8x128xf32>
    %228 = arith.addf %226, %227 : vector<8x128xf32>
    %229 = arith.negf %228 : vector<8x128xf32>
    %230 = math.exp %229 : vector<8x128xf32>
    %cst_57 = arith.constant 1.000000e+00 : f32
    %231 = vector.broadcast %cst_57 : f32 to vector<8x128xf32>
    %232 = arith.addf %231, %230 : vector<8x128xf32>
    %233 = arith.divf %231, %232 : vector<8x128xf32>
    %234 = vector.extract_strided_slice %224 {offsets = [0, 128], sizes = [8, 128], strides = [1, 1]} : vector<8x384xf32> to vector<8x128xf32>
    %235 = vector.extract_strided_slice %225 {offsets = [0, 128], sizes = [8, 128], strides = [1, 1]} : vector<8x384xf32> to vector<8x128xf32>
    %236 = arith.addf %234, %235 : vector<8x128xf32>
    %237 = arith.negf %236 : vector<8x128xf32>
    %238 = math.exp %237 : vector<8x128xf32>
    %cst_58 = arith.constant 1.000000e+00 : f32
    %239 = vector.broadcast %cst_58 : f32 to vector<8x128xf32>
    %240 = arith.addf %239, %238 : vector<8x128xf32>
    %241 = arith.divf %239, %240 : vector<8x128xf32>
    %242 = vector.extract_strided_slice %224 {offsets = [0, 256], sizes = [8, 128], strides = [1, 1]} : vector<8x384xf32> to vector<8x128xf32>
    %243 = vector.extract_strided_slice %225 {offsets = [0, 256], sizes = [8, 128], strides = [1, 1]} : vector<8x384xf32> to vector<8x128xf32>
    %244 = vector.broadcast %4 : vector<1x128xf32> to vector<8x128xf32>
    %245 = arith.addf %243, %244 : vector<8x128xf32>
    %246 = arith.mulf %233, %245 : vector<8x128xf32>
    %247 = arith.addf %242, %246 : vector<8x128xf32>
    %248 = math.tanh %247 : vector<8x128xf32>
    %cst_59 = arith.constant 1.000000e+00 : f32
    %249 = vector.broadcast %cst_59 : f32 to vector<8x128xf32>
    %250 = arith.subf %249, %241 : vector<8x128xf32>
    %251 = arith.mulf %250, %248 : vector<8x128xf32>
    %252 = arith.mulf %241, %217 : vector<8x128xf32>
    %253 = arith.addf %251, %252 : vector<8x128xf32>
    %254 = arith.index_cast %c6_i32 : i32 to index
    %c0_60 = arith.constant 0 : index
    %c0_61 = arith.constant 0 : index
    %255 = vector.load %arg9[%254, %c0_60, %c0_61] : memref<8x8x128xf32, #tpu.memory_space<vmem>>, vector<1x8x128xf32>
    %256 = vector.shape_cast %255 : vector<1x8x128xf32> to vector<8x128xf32>
    %257 = vector.shape_cast %253 : vector<8x128xf32> to vector<1x8x128xf32>
    tpu.vector_store %arg9[%254, %c0_60, %c0_61], %257 {strides = array<i32>} : memref<8x8x128xf32, #tpu.memory_space<vmem>>, vector<1x8x128xf32>,
    %c7_i32 = arith.constant 7 : i32
    %258 = arith.index_cast %c7_i32 : i32 to index
    %c0_62 = arith.constant 0 : index
    %c0_63 = arith.constant 0 : index
    %259 = vector.load %arg2[%258, %c0_62, %c0_63] : memref<8x8x384xf32, #tpu.memory_space<vmem>>, vector<1x8x384xf32>
    %260 = vector.shape_cast %259 : vector<1x8x384xf32> to vector<8x384xf32>
    %cst_64 = arith.constant dense<0.000000e+00> : vector<8x384xf32>
    %261 = tpu.matmul %253, %3, %cst_64 {dimension_numbers = #tpu.dot_dimension_numbers<[1], [0], [0], [1], [0, 0, 1, 1], [], []>} : vector<8x128xf32>, vector<128x384xf32>, vector<8x384xf32> -> vector<8x384xf32>
    %262 = vector.extract_strided_slice %260 {offsets = [0, 0], sizes = [8, 128], strides = [1, 1]} : vector<8x384xf32> to vector<8x128xf32>
    %263 = vector.extract_strided_slice %261 {offsets = [0, 0], sizes = [8, 128], strides = [1, 1]} : vector<8x384xf32> to vector<8x128xf32>
    %264 = arith.addf %262, %263 : vector<8x128xf32>
    %265 = arith.negf %264 : vector<8x128xf32>
    %266 = math.exp %265 : vector<8x128xf32>
    %cst_65 = arith.constant 1.000000e+00 : f32
    %267 = vector.broadcast %cst_65 : f32 to vector<8x128xf32>
    %268 = arith.addf %267, %266 : vector<8x128xf32>
    %269 = arith.divf %267, %268 : vector<8x128xf32>
    %270 = vector.extract_strided_slice %260 {offsets = [0, 128], sizes = [8, 128], strides = [1, 1]} : vector<8x384xf32> to vector<8x128xf32>
    %271 = vector.extract_strided_slice %261 {offsets = [0, 128], sizes = [8, 128], strides = [1, 1]} : vector<8x384xf32> to vector<8x128xf32>
    %272 = arith.addf %270, %271 : vector<8x128xf32>
    %273 = arith.negf %272 : vector<8x128xf32>
    %274 = math.exp %273 : vector<8x128xf32>
    %cst_66 = arith.constant 1.000000e+00 : f32
    %275 = vector.broadcast %cst_66 : f32 to vector<8x128xf32>
    %276 = arith.addf %275, %274 : vector<8x128xf32>
    %277 = arith.divf %275, %276 : vector<8x128xf32>
    %278 = vector.extract_strided_slice %260 {offsets = [0, 256], sizes = [8, 128], strides = [1, 1]} : vector<8x384xf32> to vector<8x128xf32>
    %279 = vector.extract_strided_slice %261 {offsets = [0, 256], sizes = [8, 128], strides = [1, 1]} : vector<8x384xf32> to vector<8x128xf32>
    %280 = vector.broadcast %4 : vector<1x128xf32> to vector<8x128xf32>
    %281 = arith.addf %279, %280 : vector<8x128xf32>
    %282 = arith.mulf %269, %281 : vector<8x128xf32>
    %283 = arith.addf %278, %282 : vector<8x128xf32>
    %284 = math.tanh %283 : vector<8x128xf32>
    %cst_67 = arith.constant 1.000000e+00 : f32
    %285 = vector.broadcast %cst_67 : f32 to vector<8x128xf32>
    %286 = arith.subf %285, %277 : vector<8x128xf32>
    %287 = arith.mulf %286, %284 : vector<8x128xf32>
    %288 = arith.mulf %277, %253 : vector<8x128xf32>
    %289 = arith.addf %287, %288 : vector<8x128xf32>
    %290 = arith.index_cast %c7_i32 : i32 to index
    %c0_68 = arith.constant 0 : index
    %c0_69 = arith.constant 0 : index
    %291 = vector.load %arg9[%290, %c0_68, %c0_69] : memref<8x8x128xf32, #tpu.memory_space<vmem>>, vector<1x8x128xf32>
    %292 = vector.shape_cast %291 : vector<1x8x128xf32> to vector<8x128xf32>
    %293 = vector.shape_cast %289 : vector<8x128xf32> to vector<1x8x128xf32>
    tpu.vector_store %arg9[%290, %c0_68, %c0_69], %293 {strides = array<i32>} : memref<8x8x128xf32, #tpu.memory_space<vmem>>, vector<1x8x128xf32>,
    %c8_i32 = arith.constant 8 : i32
    %c0_70 = arith.constant 0 : index
    %c0_71 = arith.constant 0 : index
    %294 = vector.load %arg8[%c0_70, %c0_71] : memref<8x128xf32, #tpu.memory_space<vmem>>, vector<8x128xf32>
    tpu.vector_store %arg8[%c0_70, %c0_71], %289 {strides = array<i32>} : memref<8x128xf32, #tpu.memory_space<vmem>>, vector<8x128xf32>,
    %c0_72 = arith.constant 0 : index
    %c0_73 = arith.constant 0 : index
    %295 = vector.load %arg5[%c0_72, %c0_73] : memref<1x128xf32, #tpu.memory_space<vmem>>, vector<1x128xf32>
    %c0_74 = arith.constant 0 : index
    %c0_75 = arith.constant 0 : index
    %296 = memref.load %arg6[%c0_74, %c0_75] : memref<1x1xf32, #tpu.memory_space<smem>>
    %c0_76 = arith.constant 0 : index
    %c0_77 = arith.constant 0 : index
    %c0_78 = arith.constant 0 : index
    %297 = vector.load %arg9[%c0_76, %c0_77, %c0_78] : memref<8x8x128xf32, #tpu.memory_space<vmem>>, vector<8x8x128xf32>
    %298 = vector.shape_cast %295 : vector<1x128xf32> to vector<1x1x128xf32>
    %299 = vector.broadcast %298 : vector<1x1x128xf32> to vector<8x8x128xf32>
    %300 = arith.mulf %297, %299 : vector<8x8x128xf32>
    %cst_79 = arith.constant dense<0.000000e+00> : vector<8x8xf32>
    %301 = vector.multi_reduction <add>, %300, %cst_79 [2] : vector<8x8x128xf32> to vector<8x8xf32>
    %302 = vector.broadcast %296 : f32 to vector<8x8xf32>
    %303 = arith.addf %301, %302 : vector<8x8xf32>
    %304 = arith.negf %303 : vector<8x8xf32>
    %305 = math.exp %304 : vector<8x8xf32>
    %cst_80 = arith.constant 1.000000e+00 : f32
    %306 = vector.broadcast %cst_80 : f32 to vector<8x8xf32>
    %307 = arith.addf %306, %305 : vector<8x8xf32>
    %308 = arith.divf %306, %307 : vector<8x8xf32>
    %c0_81 = arith.constant 0 : index
    %c0_82 = arith.constant 0 : index
    %c0_83 = arith.constant 0 : index
    %309 = vector.load %arg7[%c0_81, %c0_82, %c0_83] : memref<1x8x8xf32, #tpu.memory_space<vmem>>, vector<1x8x8xf32>
    %310 = vector.shape_cast %309 : vector<1x8x8xf32> to vector<8x8xf32>
    %311 = vector.shape_cast %308 : vector<8x8xf32> to vector<1x8x8xf32>
    tpu.vector_store %arg7[%c0_81, %c0_82, %c0_83], %311 {strides = array<i32>} : memref<1x8x8xf32, #tpu.memory_space<vmem>>, vector<1x8x8xf32>,
    return
  }
  func.func @transform_0(%arg0: i32, %arg1: i32) -> (i32, i32, i32) {
    %c0_i32 = arith.constant 0 : i32
    %c0_i32_0 = arith.constant 0 : i32
    return %arg1, %arg0, %c0_i32 : i32, i32, i32
  }
  func.func @transform_1(%arg0: i32, %arg1: i32) -> (i32, i32) {
    %c0_i32 = arith.constant 0 : i32
    %c0_i32_0 = arith.constant 0 : i32
    %c0_i32_1 = arith.constant 0 : i32
    return %c0_i32, %c0_i32_0 : i32, i32
  }
  func.func @transform_2(%arg0: i32, %arg1: i32) -> (i32, i32) {
    %c0_i32 = arith.constant 0 : i32
    %c0_i32_0 = arith.constant 0 : i32
    %c0_i32_1 = arith.constant 0 : i32
    return %c0_i32, %c0_i32_0 : i32, i32
  }
  func.func @transform_3(%arg0: i32, %arg1: i32) -> (i32, i32) {
    %c0_i32 = arith.constant 0 : i32
    %c0_i32_0 = arith.constant 0 : i32
    %c0_i32_1 = arith.constant 0 : i32
    return %c0_i32, %c0_i32_0 : i32, i32
  }
  func.func @transform_4(%arg0: i32, %arg1: i32) -> (i32, i32) {
    %c0_i32 = arith.constant 0 : i32
    %c0_i32_0 = arith.constant 0 : i32
    %c0_i32_1 = arith.constant 0 : i32
    return %c0_i32, %c0_i32_0 : i32, i32
  }
  func.func @transform_5(%arg0: i32, %arg1: i32) -> (i32, i32, i32) {
    %c0_i32 = arith.constant 0 : i32
    %c0_i32_0 = arith.constant 0 : i32
    return %arg0, %arg1, %c0_i32 : i32, i32, i32
  }
}

</mosaic_0001>

<llo_original>
// kernel: tpu_custom_call.1
$region0: #{tpu_custom_call.1}
  #allocation0 [shape = 'u32[]', space=smem, size = 0x4, offset = 0x4, fixed_abs, tag = 'smem constant byte address 0x4 - core index']
  #allocation1 [shape = 'u32[144,128]{1,0:T(1,128)}', space=vmem, size = 0x12000, scoped, tag = 'internal scratch']
  #allocation2 [shape = 'f32[8,128]{1,0:T(8,128)}', space=vmem, size = 0x1000, scoped, tag = 'scratch operand']
  #allocation3 [shape = 'f32[8,8,128]{2,1,0:T(8,128)}', space=vmem, size = 0x8000, scoped, tag = 'scratch operand']
  #allocation4 [shape = 'f32[1,1]{1,0:T(1,128)S(6)}', space=smem, size = 0x200, scoped, tag = 'scoped memory for tpu_custom_call.1']
  %s0 = inlined_call_operand.hbm [shape: f32[8,8,384], index: 0, kind: input, shape index: {}]
  %s1 = inlined_call_operand.hbm [shape: f32[128,384], index: 1, kind: input, shape index: {}]
  %s2 = inlined_call_operand.vmem [shape: f32[1,128], index: 2, kind: input, shape index: {}]
  %s3 = inlined_call_operand.vmem [shape: f32[1,128], index: 3, kind: input, shape index: {}]
  %s4 = inlined_call_operand.<no memory space> [shape: f32[1,1], index: 4, kind: input, shape index: {}]
  %s5 = inlined_call_operand.hbm [shape: f32[1,8,8], index: 5, kind: output, shape index: {}]
  %s6 = sld [smem:[#allocation0]]
  $region42: #{tpu_custom_call.1} parent=0
    _
  %s8 = ssub.s32 1, %s6
  %s9 = scalar_select 0, %s8, %s6
  %10 = sst [smem:[#allocation4]] %s4
  $region1: #{tpu_custom_call.1} parent=0
    #allocation5 [shape = 'u8[98304]{0}', space=vmem, size = 0x18000, scoped, tag = 'input window, operand 0, single buffered']
    #allocation6 [shape = 's32[1]{0}', space=sflag, size = 0x4, scoped, tag = 'scoped memory for tpu_custom_call.1']
    #allocation7 [shape = 's32[1]{0}', space=sflag, size = 0x4, scoped, tag = 'scoped memory for tpu_custom_call.1']
    #allocation8 [shape = 'u8[196608]{0}', space=vmem, size = 0x30000, scoped, tag = 'input window, operand 1, single buffered']
    #allocation9 [shape = 's32[1]{0}', space=sflag, size = 0x4, scoped, tag = 'scoped memory for tpu_custom_call.1']
    #allocation10 [shape = 'u8[4096]{0}', space=vmem, size = 0x1000, scoped, tag = 'output window, operand 0, single buffered']
    %11 = vsyncpa [#allocation6], 0
    %12 = vsyncpa [#allocation9], 0
    %13 = vsyncpa [#allocation7], 0
    // Predicated region
    $region2: #{tpu_custom_call.1} parent=1 // pred_check
      _
    $region3: #{tpu_custom_call.1} parent=1 // pred_check_branch
      %15 = sbr.rel (0) target = $region5
    $region4: #{tpu_custom_call.1} parent=1 // pred_region
      %s17 = ssub.s32 3072, 3072
      %18 = vsyncadd [#allocation6], %s17
      %s19 = sshll.u32 [#allocation5], 4
      %s20 = int_to_ptr.vmem [resolvable:$true] %s19
      %25 = dma.hbm_to_vmem [thread:$0]  %s0, 3072, %s20, [#allocation6], 384, 384, 24
    $region5: #{tpu_custom_call.1} parent=1 // pred_fallthru
      _
    // Predicated region
    $region6: #{tpu_custom_call.1} parent=1 // pred_check
      _
    $region7: #{tpu_custom_call.1} parent=1 // pred_check_branch
      %27 = sbr.rel (0) target = $region9
    $region8: #{tpu_custom_call.1} parent=1 // pred_region
      %s29 = ssub.s32 6144, 6144
      %30 = vsyncadd [#allocation9], %s29
      %s31 = sshll.u32 [#allocation8], 4
      %s32 = int_to_ptr.vmem [resolvable:$true] %s31
      %37 = dma.hbm_to_vmem [thread:$0]  %s1, 6144, %s32, [#allocation9], 384, 384, 24
    $region9: #{tpu_custom_call.1} parent=1 // pred_fallthru
      _
    // Predicated region
    $region10: #{tpu_custom_call.1} parent=1 // pred_check
      _
    $region11: #{tpu_custom_call.1} parent=1 // pred_check_branch
      %39 = sbr.rel (0) target = $region13
    $region12: #{tpu_custom_call.1} parent=1 // pred_region
      _
    $region13: #{tpu_custom_call.1} parent=1 // pred_fallthru
      _
    // Predicated region
    $region14: #{tpu_custom_call.1} parent=1 // pred_check
      _
    $region15: #{tpu_custom_call.1} parent=1 // pred_check_branch
      %41 = sbr.rel (0) target = $region17
    $region16: #{tpu_custom_call.1} parent=1 // pred_region
      _
    $region17: #{tpu_custom_call.1} parent=1 // pred_fallthru
      _
    // Predicated region
    $region18: #{tpu_custom_call.1} parent=1 // pred_check
      _
    $region19: #{tpu_custom_call.1} parent=1 // pred_check_branch
      %43 = sbr.rel (0) target = $region21
    $region20: #{tpu_custom_call.1} parent=1 // pred_region
      _
    $region21: #{tpu_custom_call.1} parent=1 // pred_fallthru
      _
    // Predicated region
    $region22: #{tpu_custom_call.1} parent=1 // pred_check
      _
    $region23: #{tpu_custom_call.1} parent=1 // pred_check_branch
      %45 = sbr.rel (0) target = $region25
    $region24: #{tpu_custom_call.1} parent=1 // pred_region
      %46 = dma.done [#allocation6], 3072
    $region25: #{tpu_custom_call.1} parent=1 // pred_fallthru
      _
    // Predicated region
    $region26: #{tpu_custom_call.1} parent=1 // pred_check
      _
    $region27: #{tpu_custom_call.1} parent=1 // pred_check_branch
      %48 = sbr.rel (0) target = $region29
    $region28: #{tpu_custom_call.1} parent=1 // pred_region
      %49 = dma.done [#allocation9], 6144
    $region29: #{tpu_custom_call.1} parent=1 // pred_fallthru
      _
    %p50 = scmp.eq.s32.totalorder 0, 0
    // Predicated region
    $region30: #{tpu_custom_call.1} parent=1 // pred_check
      %p51 = pneg %p50
    $region31: #{tpu_custom_call.1} parent=1 // pred_check_branch
      %53 = sbr.rel (%p51) target = $region33
    $region32: #{tpu_custom_call.1} parent=1 // pred_region
      %54 = vst [vmem:[#allocation2] sm:$0xff] 0.0
    $region33: #{tpu_custom_call.1} parent=1 // pred_fallthru
      _
    %v55 = vld [vmem:[#allocation8] sm:$0xff]
    %v56 = vld [vmem:[#allocation8 + $0x8] sm:$0xff]
    %v57 = vld [vmem:[#allocation8 + $0x10] sm:$0xff]
    %v58 = vld [vmem:[#allocation8 + $0x18] sm:$0xff]
    %v59 = vld [vmem:[#allocation8 + $0x20] sm:$0xff]
    %v60 = vld [vmem:[#allocation8 + $0x28] sm:$0xff]
    %v61 = vld [vmem:[#allocation8 + $0x30] sm:$0xff]
    %v62 = vld [vmem:[#allocation8 + $0x38] sm:$0xff]
    %v63 = vld [vmem:[#allocation8 + $0x40] sm:$0xff]
    %v64 = vld [vmem:[#allocation8 + $0x48] sm:$0xff]
    %v65 = vld [vmem:[#allocation8 + $0x50] sm:$0xff]
    %v66 = vld [vmem:[#allocation8 + $0x58] sm:$0xff]
    %v67 = vld [vmem:[#allocation8 + $0x60] sm:$0xff]
    %v68 = vld [vmem:[#allocation8 + $0x68] sm:$0xff]
    %v69 = vld [vmem:[#allocation8 + $0x70] sm:$0xff]
    %v70 = vld [vmem:[#allocation8 + $0x78] sm:$0xff]
    %v71 = vld [vmem:[#allocation8 + $0x80] sm:$0xff]
    %v72 = vld [vmem:[#allocation8 + $0x88] sm:$0xff]
    %v73 = vld [vmem:[#allocation8 + $0x90] sm:$0xff]
    %v74 = vld [vmem:[#allocation8 + $0x98] sm:$0xff]
    %v75 = vld [vmem:[#allocation8 + $0xa0] sm:$0xff]
    %v76 = vld [vmem:[#allocation8 + $0xa8] sm:$0xff]
    %v77 = vld [vmem:[#allocation8 + $0xb0] sm:$0xff]
    %v78 = vld [vmem:[#allocation8 + $0xb8] sm:$0xff]
    %v79 = vld [vmem:[#allocation8 + $0xc0] sm:$0xff]
    %v80 = vld [vmem:[#allocation8 + $0xc8] sm:$0xff]
    %v81 = vld [vmem:[#allocation8 + $0xd0] sm:$0xff]
    %v82 = vld [vmem:[#allocation8 + $0xd8] sm:$0xff]
    %v83 = vld [vmem:[#allocation8 + $0xe0] sm:$0xff]
    %v84 = vld [vmem:[#allocation8 + $0xe8] sm:$0xff]
    %v85 = vld [vmem:[#allocation8 + $0xf0] sm:$0xff]
    %v86 = vld [vmem:[#allocation8 + $0xf8] sm:$0xff]
    %v87 = vld [vmem:[#allocation8 + $0x100] sm:$0xff]
    %v88 = vld [vmem:[#allocation8 + $0x108] sm:$0xff]
    %v89 = vld [vmem:[#allocation8 + $0x110] sm:$0xff]
    %v90 = vld [vmem:[#allocation8 + $0x118] sm:$0xff]
    %v91 = vld [vmem:[#allocation8 + $0x120] sm:$0xff]
    %v92 = vld [vmem:[#allocation8 + $0x128] sm:$0xff]
    %v93 = vld [vmem:[#allocation8 + $0x130] sm:$0xff]
    %v94 = vld [vmem:[#allocation8 + $0x138] sm:$0xff]
    %v95 = vld [vmem:[#allocation8 + $0x140] sm:$0xff]
    %v96 = vld [vmem:[#allocation8 + $0x148] sm:$0xff]
    %v97 = vld [vmem:[#allocation8 + $0x150] sm:$0xff]
    %v98 = vld [vmem:[#allocation8 + $0x158] sm:$0xff]
    %v99 = vld [vmem:[#allocation8 + $0x160] sm:$0xff]
    %v100 = vld [vmem:[#allocation8 + $0x168] sm:$0xff]
    %v101 = vld [vmem:[#allocation8 + $0x170] sm:$0xff]
    %v102 = vld [vmem:[#allocation8 + $0x178] sm:$0xff]
    %v103 = vld [vmem:[%s2] sm:$0x1]
    %v104 = vld [vmem:[#allocation2] sm:$0xff]
    %v105 = vld [vmem:[#allocation5] sm:$0xff]
    %v106 = vld [vmem:[#allocation5 + $0x8] sm:$0xff]
    %v107 = vld [vmem:[#allocation5 + $0x10] sm:$0xff]
    %108 = vmatprep.subr.mxu0 %v56
    %109 = vmatpush1.msra.mxu0 %v55
    %110 = vmatprep.subr.mxu0 %v59
    %111 = vmatpush1.msra.mxu0 %v58
    %112 = vmatprep.subr.mxu0 %v62
    %113 = vmatpush1.msra.mxu0 %v61
    %114 = vmatprep.subr.mxu0 %v65
    %115 = vmatpush1.msra.mxu0 %v64
    %116 = vmatprep.subr.mxu0 %v68
    %117 = vmatpush1.msra.mxu0 %v67
    %118 = vmatprep.subr.mxu0 %v71
    %119 = vmatpush1.msra.mxu0 %v70
    %120 = vmatprep.subr.mxu0 %v74
    %121 = vmatpush1.msra.mxu0 %v73
    %122 = vmatprep.subr.mxu0 %v77
    %123 = vmatpush1.msra.mxu0 %v76
    %124 = vmatprep.subr.mxu0 %v80
    %125 = vmatpush1.msra.mxu0 %v79
    %126 = vmatprep.subr.mxu0 %v83
    %127 = vmatpush1.msra.mxu0 %v82
    %128 = vmatprep.subr.mxu0 %v86
    %129 = vmatpush1.msra.mxu0 %v85
    %130 = vmatprep.subr.mxu0 %v89
    %131 = vmatpush1.msra.mxu0 %v88
    %132 = vmatprep.subr.mxu0 %v92
    %133 = vmatpush1.msra.mxu0 %v91
    %134 = vmatprep.subr.mxu0 %v95
    %135 = vmatpush1.msra.mxu0 %v94
    %136 = vmatprep.subr.mxu0 %v98
    %137 = vmatpush1.msra.mxu0 %v97
    %138 = vmatprep.subr.mxu0 %v101
    %139 = vmatpush1.msra.mxu0 %v100
    %140 = vmatprep.subr.mxu0 0.0
    %141 = vmatpush1.msra.mxu0 0.0
    %142 = vmatprep.subr.mxu0 0.0
    %143 = vmatpush1.msra.mxu0 0.0
    %144 = vmatprep.subr.mxu0 0.0
    %145 = vmatpush1.msra.mxu0 0.0
    %146 = vmatprep.subr.mxu0 0.0
    %147 = vmatpush1.msra.mxu0 0.0
    %148 = vmatprep.subr.mxu0 0.0
    %149 = vmatpush1.msra.mxu0 0.0
    %150 = vmatprep.subr.mxu0 0.0
    %151 = vmatpush1.msra.mxu0 0.0
    %152 = vmatprep.subr.mxu0 0.0
    %153 = vmatpush1.msra.mxu0 0.0
    %154 = vmatprep.subr.mxu0 0.0
    %155 = vmatpush1.msra.mxu0 0.0
    %156 = vmatprep.subr.mxu0 0.0
    %157 = vmatpush1.msra.mxu0 0.0
    %158 = vmatprep.subr.mxu0 0.0
    %159 = vmatpush1.msra.mxu0 0.0
    %160 = vmatprep.subr.mxu0 0.0
    %161 = vmatpush1.msra.mxu0 0.0
    %162 = vmatprep.subr.mxu0 0.0
    %163 = vmatpush1.msra.mxu0 0.0
    %164 = vmatprep.subr.mxu0 0.0
    %165 = vmatpush1.msra.mxu0 0.0
    %166 = vmatprep.subr.mxu0 0.0
    %167 = vmatpush1.msra.mxu0 0.0
    %168 = vmatprep.subr.mxu0 0.0
    %169 = vmatpush1.msra.mxu0 0.0
    %170 = vmatprep.subr.mxu0 0.0
    %171 = vmatpush1.msra.mxu0 0.0
    %172 = vmatprep.mubr.f32.mxu0 0.0
    %173 = vmatmul.mubr.f32.gmra.mrb[0].mxu0 %v104
    %v174 = vpop.f32.mrb[0].mxu0
    %v175 = vadd.f32 0.0, %v174
    %v176 = vpop.f32.mrb[0].mxu0
    %v177 = vadd.f32 0.0, %v176
    %178 = vdwg.mxu0
    %179 = vmatprep.subr.mxu0 0.0
    %180 = vmatpush1.msra.mxu0 %v57
    %181 = vmatprep.subr.mxu0 0.0
    %182 = vmatpush1.msra.mxu0 %v60
    %183 = vmatprep.subr.mxu0 0.0
    %184 = vmatpush1.msra.mxu0 %v63
    %185 = vmatprep.subr.mxu0 0.0
    %186 = vmatpush1.msra.mxu0 %v66
    %187 = vmatprep.subr.mxu0 0.0
    %188 = vmatpush1.msra.mxu0 %v69
    %189 = vmatprep.subr.mxu0 0.0
    %190 = vmatpush1.msra.mxu0 %v72
    %191 = vmatprep.subr.mxu0 0.0
    %192 = vmatpush1.msra.mxu0 %v75
    %193 = vmatprep.subr.mxu0 0.0
    %194 = vmatpush1.msra.mxu0 %v78
    %195 = vmatprep.subr.mxu0 0.0
    %196 = vmatpush1.msra.mxu0 %v81
    %197 = vmatprep.subr.mxu0 0.0
    %198 = vmatpush1.msra.mxu0 %v84
    %199 = vmatprep.subr.mxu0 0.0
    %200 = vmatpush1.msra.mxu0 %v87
    %201 = vmatprep.subr.mxu0 0.0
    %202 = vmatpush1.msra.mxu0 %v90
    %203 = vmatprep.subr.mxu0 0.0
    %204 = vmatpush1.msra.mxu0 %v93
    %205 = vmatprep.subr.mxu0 0.0
    %206 = vmatpush1.msra.mxu0 %v96
    %207 = vmatprep.subr.mxu0 0.0
    %208 = vmatpush1.msra.mxu0 %v99
    %209 = vmatprep.subr.mxu0 0.0
    %210 = vmatpush1.msra.mxu0 %v102
    %211 = vmatprep.subr.mxu0 0.0
    %212 = vmatpush1.msra.mxu0 0.0
    %213 = vmatprep.subr.mxu0 0.0
    %214 = vmatpush1.msra.mxu0 0.0
    %215 = vmatprep.subr.mxu0 0.0
    %216 = vmatpush1.msra.mxu0 0.0
    %217 = vmatprep.subr.mxu0 0.0
    %218 = vmatpush1.msra.mxu0 0.0
    %219 = vmatprep.subr.mxu0 0.0
    %220 = vmatpush1.msra.mxu0 0.0
    %221 = vmatprep.subr.mxu0 0.0
    %222 = vmatpush1.msra.mxu0 0.0
    %223 = vmatprep.subr.mxu0 0.0
    %224 = vmatpush1.msra.mxu0 0.0
    %225 = vmatprep.subr.mxu0 0.0
    %226 = vmatpush1.msra.mxu0 0.0
    %227 = vmatprep.subr.mxu0 0.0
    %228 = vmatpush1.msra.mxu0 0.0
    %229 = vmatprep.subr.mxu0 0.0
    %230 = vmatpush1.msra.mxu0 0.0
    %231 = vmatprep.subr.mxu0 0.0
    %232 = vmatpush1.msra.mxu0 0.0
    %233 = vmatprep.subr.mxu0 0.0
    %234 = vmatpush1.msra.mxu0 0.0
    %235 = vmatprep.subr.mxu0 0.0
    %236 = vmatpush1.msra.mxu0 0.0
    %237 = vmatprep.subr.mxu0 0.0
    %238 = vmatpush1.msra.mxu0 0.0
    %239 = vmatprep.subr.mxu0 0.0
    %240 = vmatpush1.msra.mxu0 0.0
    %241 = vmatprep.subr.mxu0 0.0
    %242 = vmatpush1.msra.mxu0 0.0
    %243 = vmatprep.mubr.f32.mxu0 0.0
    %244 = vmatmul.mubr.f32.gmra.mrb[0].mxu0 %v104
    %v245 = vpop.f32.mrb[0].mxu0
    %v246 = vadd.f32 0.0, %v245
    %v247 = vpop.f32.mrb[0].mxu0
    %248 = vdwg.mxu0
    %v249 = vadd.f32 %v105, %v175
    %v250 = vxor.u32 %v249, 2147483648
    %v251 = vmul.f32 %v250, 1.442695
    %v252 = vpow.pop %v251
    %v253 = vadd.f32 %v252, 1.0
    %v254 = vrcp.pop %v253
    %v255 = vmul.f32 1.0, %v254
    %v256 = vadd.f32 %v106, %v177
    %v257 = vxor.u32 %v256, 2147483648
    %v258 = vmul.f32 %v257, 1.442695
    %v259 = vpow.pop %v258
    %v260 = vadd.f32 %v259, 1.0
    %v261 = vrcp.pop %v260
    %v262 = vmul.f32 1.0, %v261
    %v264 = vlaneseq
    %v265 = vshrl.u32 %v264, 7
    %v266 = vsub.s32 0, %v265
    %v267 = vrot.slane %v103, %v266
    %v269 = vadd.f32 %v246, %v267
    %v270 = vmul.f32 %v255, %v269
    %v271 = vadd.f32 %v107, %v270
    %v272 = vtanh.pop %v271
    %v273 = vsub.f32 1.0, %v262
    %v274 = vmul.f32 %v273, %v272
    %v275 = vmul.f32 %v262, %v104
    %v276 = vadd.f32 %v274, %v275
    %277 = vst [vmem:[#allocation3] sm:$0xff] %v276
    %s278 = scalar_lea.vmem [#allocation5], 24
    %v279 = vld [vmem:[%s278] sm:$0xff]
    %v280 = vld [vmem:[%s278 + $0x8] sm:$0xff]
    %v281 = vld [vmem:[%s278 + $0x10] sm:$0xff]
    %282 = vmatprep.subr.mxu0 %v56
    %283 = vmatpush1.msra.mxu0 %v55
    %284 = vmatprep.subr.mxu0 %v59
    %285 = vmatpush1.msra.mxu0 %v58
    %286 = vmatprep.subr.mxu0 %v62
    %287 = vmatpush1.msra.mxu0 %v61
    %288 = vmatprep.subr.mxu0 %v65
    %289 = vmatpush1.msra.mxu0 %v64
    %290 = vmatprep.subr.mxu0 %v68
    %291 = vmatpush1.msra.mxu0 %v67
    %292 = vmatprep.subr.mxu0 %v71
    %293 = vmatpush1.msra.mxu0 %v70
    %294 = vmatprep.subr.mxu0 %v74
    %295 = vmatpush1.msra.mxu0 %v73
    %296 = vmatprep.subr.mxu0 %v77
    %297 = vmatpush1.msra.mxu0 %v76
    %298 = vmatprep.subr.mxu0 %v80
    %299 = vmatpush1.msra.mxu0 %v79
    %300 = vmatprep.subr.mxu0 %v83
    %301 = vmatpush1.msra.mxu0 %v82
    %302 = vmatprep.subr.mxu0 %v86
    %303 = vmatpush1.msra.mxu0 %v85
    %304 = vmatprep.subr.mxu0 %v89
    %305 = vmatpush1.msra.mxu0 %v88
    %306 = vmatprep.subr.mxu0 %v92
    %307 = vmatpush1.msra.mxu0 %v91
    %308 = vmatprep.subr.mxu0 %v95
    %309 = vmatpush1.msra.mxu0 %v94
    %310 = vmatprep.subr.mxu0 %v98
    %311 = vmatpush1.msra.mxu0 %v97
    %312 = vmatprep.subr.mxu0 %v101
    %313 = vmatpush1.msra.mxu0 %v100
    %314 = vmatprep.subr.mxu0 0.0
    %315 = vmatpush1.msra.mxu0 0.0
    %316 = vmatprep.subr.mxu0 0.0
    %317 = vmatpush1.msra.mxu0 0.0
    %318 = vmatprep.subr.mxu0 0.0
    %319 = vmatpush1.msra.mxu0 0.0
    %320 = vmatprep.subr.mxu0 0.0
    %321 = vmatpush1.msra.mxu0 0.0
    %322 = vmatprep.subr.mxu0 0.0
    %323 = vmatpush1.msra.mxu0 0.0
    %324 = vmatprep.subr.mxu0 0.0
    %325 = vmatpush1.msra.mxu0 0.0
    %326 = vmatprep.subr.mxu0 0.0
    %327 = vmatpush1.msra.mxu0 0.0
    %328 = vmatprep.subr.mxu0 0.0
    %329 = vmatpush1.msra.mxu0 0.0
    %330 = vmatprep.subr.mxu0 0.0
    %331 = vmatpush1.msra.mxu0 0.0
    %332 = vmatprep.subr.mxu0 0.0
    %333 = vmatpush1.msra.mxu0 0.0
    %334 = vmatprep.subr.mxu0 0.0
    %335 = vmatpush1.msra.mxu0 0.0
    %336 = vmatprep.subr.mxu0 0.0
    %337 = vmatpush1.msra.mxu0 0.0
    %338 = vmatprep.subr.mxu0 0.0
    %339 = vmatpush1.msra.mxu0 0.0
    %340 = vmatprep.subr.mxu0 0.0
    %341 = vmatpush1.msra.mxu0 0.0
    %342 = vmatprep.subr.mxu0 0.0
    %343 = vmatpush1.msra.mxu0 0.0
    %344 = vmatprep.subr.mxu0 0.0
    %345 = vmatpush1.msra.mxu0 0.0
    %346 = vmatprep.mubr.f32.mxu0 0.0
    %347 = vmatmul.mubr.f32.gmra.mrb[0].mxu0 %v276
    %v348 = vpop.f32.mrb[0].mxu0
    %v349 = vadd.f32 0.0, %v348
    %v350 = vpop.f32.mrb[0].mxu0
    %v351 = vadd.f32 0.0, %v350
    %352 = vdwg.mxu0
    %353 = vmatprep.subr.mxu0 0.0
    %354 = vmatpush1.msra.mxu0 %v57
    %355 = vmatprep.subr.mxu0 0.0
    %356 = vmatpush1.msra.mxu0 %v60
    %357 = vmatprep.subr.mxu0 0.0
    %358 = vmatpush1.msra.mxu0 %v63
    %359 = vmatprep.subr.mxu0 0.0
    %360 = vmatpush1.msra.mxu0 %v66
    %361 = vmatprep.subr.mxu0 0.0
    %362 = vmatpush1.msra.mxu0 %v69
    %363 = vmatprep.subr.mxu0 0.0
    %364 = vmatpush1.msra.mxu0 %v72
    %365 = vmatprep.subr.mxu0 0.0
    %366 = vmatpush1.msra.mxu0 %v75
    %367 = vmatprep.subr.mxu0 0.0
    %368 = vmatpush1.msra.mxu0 %v78
    %369 = vmatprep.subr.mxu0 0.0
    %370 = vmatpush1.msra.mxu0 %v81
    %371 = vmatprep.subr.mxu0 0.0
    %372 = vmatpush1.msra.mxu0 %v84
    %373 = vmatprep.subr.mxu0 0.0
    %374 = vmatpush1.msra.mxu0 %v87
    %375 = vmatprep.subr.mxu0 0.0
    %376 = vmatpush1.msra.mxu0 %v90
    %377 = vmatprep.subr.mxu0 0.0
    %378 = vmatpush1.msra.mxu0 %v93
    %379 = vmatprep.subr.mxu0 0.0
    %380 = vmatpush1.msra.mxu0 %v96
    %381 = vmatprep.subr.mxu0 0.0
    %382 = vmatpush1.msra.mxu0 %v99
    %383 = vmatprep.subr.mxu0 0.0
    %384 = vmatpush1.msra.mxu0 %v102
    %385 = vmatprep.subr.mxu0 0.0
    %386 = vmatpush1.msra.mxu0 0.0
    %387 = vmatprep.subr.mxu0 0.0
    %388 = vmatpush1.msra.mxu0 0.0
    %389 = vmatprep.subr.mxu0 0.0
    %390 = vmatpush1.msra.mxu0 0.0
    %391 = vmatprep.subr.mxu0 0.0
    %392 = vmatpush1.msra.mxu0 0.0
    %393 = vmatprep.subr.mxu0 0.0
    %394 = vmatpush1.msra.mxu0 0.0
    %395 = vmatprep.subr.mxu0 0.0
    %396 = vmatpush1.msra.mxu0 0.0
    %397 = vmatprep.subr.mxu0 0.0
    %398 = vmatpush1.msra.mxu0 0.0
    %399 = vmatprep.subr.mxu0 0.0
    %400 = vmatpush1.msra.mxu0 0.0
    %401 = vmatprep.subr.mxu0 0.0
    %402 = vmatpush1.msra.mxu0 0.0
    %403 = vmatprep.subr.mxu0 0.0
    %404 = vmatpush1.msra.mxu0 0.0
    %405 = vmatprep.subr.mxu0 0.0
    %406 = vmatpush1.msra.mxu0 0.0
    %407 = vmatprep.subr.mxu0 0.0
    %408 = vmatpush1.msra.mxu0 0.0
    %409 = vmatprep.subr.mxu0 0.0
    %410 = vmatpush1.msra.mxu0 0.0
    %411 = vmatprep.subr.mxu0 0.0
    %412 = vmatpush1.msra.mxu0 0.0
    %413 = vmatprep.subr.mxu0 0.0
    %414 = vmatpush1.msra.mxu0 0.0
    %415 = vmatprep.subr.mxu0 0.0
    %416 = vmatpush1.msra.mxu0 0.0
    %417 = vmatprep.mubr.f32.mxu0 0.0
    %418 = vmatmul.mubr.f32.gmra.mrb[0].mxu0 %v276
    %v419 = vpop.f32.mrb[0].mxu0
    %v420 = vadd.f32 0.0, %v419
    %v421 = vpop.f32.mrb[0].mxu0
    %422 = vdwg.mxu0
    %v423 = vadd.f32 %v279, %v349
    %v424 = vxor.u32 %v423, 2147483648
    %v425 = vmul.f32 %v424, 1.442695
    %v426 = vpow.pop %v425
    %v427 = vadd.f32 %v426, 1.0
    %v428 = vrcp.pop %v427
    %v429 = vmul.f32 1.0, %v428
    %v430 = vadd.f32 %v280, %v351
    %v431 = vxor.u32 %v430, 2147483648
    %v432 = vmul.f32 %v431, 1.442695
    %v433 = vpow.pop %v432
    %v434 = vadd.f32 %v433, 1.0
    %v435 = vrcp.pop %v434
    %v436 = vmul.f32 1.0, %v435
    %v437 = vadd.f32 %v420, %v267
    %v438 = vmul.f32 %v429, %v437
    %v439 = vadd.f32 %v281, %v438
    %v440 = vtanh.pop %v439
    %v441 = vsub.f32 1.0, %v436
    %v442 = vmul.f32 %v441, %v440
    %v443 = vmul.f32 %v436, %v276
    %v444 = vadd.f32 %v442, %v443
    %s445 = scalar_lea.vmem [#allocation3], 8
    %446 = vst [vmem:[%s445] sm:$0xff] %v444
    %s447 = scalar_lea.vmem [#allocation5], 48
    %v448 = vld [vmem:[%s447] sm:$0xff]
    %v449 = vld [vmem:[%s447 + $0x8] sm:$0xff]
    %v450 = vld [vmem:[%s447 + $0x10] sm:$0xff]
    %451 = vmatprep.subr.mxu0 %v56
    %452 = vmatpush1.msra.mxu0 %v55
    %453 = vmatprep.subr.mxu0 %v59
    %454 = vmatpush1.msra.mxu0 %v58
    %455 = vmatprep.subr.mxu0 %v62
    %456 = vmatpush1.msra.mxu0 %v61
    %457 = vmatprep.subr.mxu0 %v65
    %458 = vmatpush1.msra.mxu0 %v64
    %459 = vmatprep.subr.mxu0 %v68
    %460 = vmatpush1.msra.mxu0 %v67
    %461 = vmatprep.subr.mxu0 %v71
    %462 = vmatpush1.msra.mxu0 %v70
    %463 = vmatprep.subr.mxu0 %v74
    %464 = vmatpush1.msra.mxu0 %v73
    %465 = vmatprep.subr.mxu0 %v77
    %466 = vmatpush1.msra.mxu0 %v76
    %467 = vmatprep.subr.mxu0 %v80
    %468 = vmatpush1.msra.mxu0 %v79
    %469 = vmatprep.subr.mxu0 %v83
    %470 = vmatpush1.msra.mxu0 %v82
    %471 = vmatprep.subr.mxu0 %v86
    %472 = vmatpush1.msra.mxu0 %v85
    %473 = vmatprep.subr.mxu0 %v89
    %474 = vmatpush1.msra.mxu0 %v88
    %475 = vmatprep.subr.mxu0 %v92
    %476 = vmatpush1.msra.mxu0 %v91
    %477 = vmatprep.subr.mxu0 %v95
    %478 = vmatpush1.msra.mxu0 %v94
    %479 = vmatprep.subr.mxu0 %v98
    %480 = vmatpush1.msra.mxu0 %v97
    %481 = vmatprep.subr.mxu0 %v101
    %482 = vmatpush1.msra.mxu0 %v100
    %483 = vmatprep.subr.mxu0 0.0
    %484 = vmatpush1.msra.mxu0 0.0
    %485 = vmatprep.subr.mxu0 0.0
    %486 = vmatpush1.msra.mxu0 0.0
    %487 = vmatprep.subr.mxu0 0.0
    %488 = vmatpush1.msra.mxu0 0.0
    %489 = vmatprep.subr.mxu0 0.0
    %490 = vmatpush1.msra.mxu0 0.0
    %491 = vmatprep.subr.mxu0 0.0
    %492 = vmatpush1.msra.mxu0 0.0
    %493 = vmatprep.subr.mxu0 0.0
    %494 = vmatpush1.msra.mxu0 0.0
    %495 = vmatprep.subr.mxu0 0.0
    %496 = vmatpush1.msra.mxu0 0.0
    %497 = vmatprep.subr.mxu0 0.0
    %498 = vmatpush1.msra.mxu0 0.0
    %499 = vmatprep.subr.mxu0 0.0
    %500 = vmatpush1.msra.mxu0 0.0
    %501 = vmatprep.subr.mxu0 0.0
    %502 = vmatpush1.msra.mxu0 0.0
    %503 = vmatprep.subr.mxu0 0.0
    %504 = vmatpush1.msra.mxu0 0.0
    %505 = vmatprep.subr.mxu0 0.0
    %506 = vmatpush1.msra.mxu0 0.0
    %507 = vmatprep.subr.mxu0 0.0
    %508 = vmatpush1.msra.mxu0 0.0
    %509 = vmatprep.subr.mxu0 0.0
    %510 = vmatpush1.msra.mxu0 0.0
    %511 = vmatprep.subr.mxu0 0.0
    %512 = vmatpush1.msra.mxu0 0.0
    %513 = vmatprep.subr.mxu0 0.0
    %514 = vmatpush1.msra.mxu0 0.0
    %515 = vmatprep.mubr.f32.mxu0 0.0
    %516 = vmatmul.mubr.f32.gmra.mrb[0].mxu0 %v444
    %v517 = vpop.f32.mrb[0].mxu0
    %v518 = vadd.f32 0.0, %v517
    %v519 = vpop.f32.mrb[0].mxu0
    %v520 = vadd.f32 0.0, %v519
    %521 = vdwg.mxu0
    %522 = vmatprep.subr.mxu0 0.0
    %523 = vmatpush1.msra.mxu0 %v57
    %524 = vmatprep.subr.mxu0 0.0
    %525 = vmatpush1.msra.mxu0 %v60
    %526 = vmatprep.subr.mxu0 0.0
    %527 = vmatpush1.msra.mxu0 %v63
    %528 = vmatprep.subr.mxu0 0.0
    %529 = vmatpush1.msra.mxu0 %v66
    %530 = vmatprep.subr.mxu0 0.0
    %531 = vmatpush1.msra.mxu0 %v69
    %532 = vmatprep.subr.mxu0 0.0
    %533 = vmatpush1.msra.mxu0 %v72
    %534 = vmatprep.subr.mxu0 0.0
    %535 = vmatpush1.msra.mxu0 %v75
    %536 = vmatprep.subr.mxu0 0.0
    %537 = vmatpush1.msra.mxu0 %v78
    %538 = vmatprep.subr.mxu0 0.0
    %539 = vmatpush1.msra.mxu0 %v81
    %540 = vmatprep.subr.mxu0 0.0
    %541 = vmatpush1.msra.mxu0 %v84
    %542 = vmatprep.subr.mxu0 0.0
    %543 = vmatpush1.msra.mxu0 %v87
    %544 = vmatprep.subr.mxu0 0.0
    %545 = vmatpush1.msra.mxu0 %v90
    %546 = vmatprep.subr.mxu0 0.0
    %547 = vmatpush1.msra.mxu0 %v93
    %548 = vmatprep.subr.mxu0 0.0
    %549 = vmatpush1.msra.mxu0 %v96
    %550 = vmatprep.subr.mxu0 0.0
    %551 = vmatpush1.msra.mxu0 %v99
    %552 = vmatprep.subr.mxu0 0.0
    %553 = vmatpush1.msra.mxu0 %v102
    %554 = vmatprep.subr.mxu0 0.0
    %555 = vmatpush1.msra.mxu0 0.0
    %556 = vmatprep.subr.mxu0 0.0
    %557 = vmatpush1.msra.mxu0 0.0
    %558 = vmatprep.subr.mxu0 0.0
    %559 = vmatpush1.msra.mxu0 0.0
    %560 = vmatprep.subr.mxu0 0.0
    %561 = vmatpush1.msra.mxu0 0.0
    %562 = vmatprep.subr.mxu0 0.0
    %563 = vmatpush1.msra.mxu0 0.0
    %564 = vmatprep.subr.mxu0 0.0
    %565 = vmatpush1.msra.mxu0 0.0
    %566 = vmatprep.subr.mxu0 0.0
    %567 = vmatpush1.msra.mxu0 0.0
    %568 = vmatprep.subr.mxu0 0.0
    %569 = vmatpush1.msra.mxu0 0.0
    %570 = vmatprep.subr.mxu0 0.0
    %571 = vmatpush1.msra.mxu0 0.0
    %572 = vmatprep.subr.mxu0 0.0
    %573 = vmatpush1.msra.mxu0 0.0
    %574 = vmatprep.subr.mxu0 0.0
    %575 = vmatpush1.msra.mxu0 0.0
    %576 = vmatprep.subr.mxu0 0.0
    %577 = vmatpush1.msra.mxu0 0.0
    %578 = vmatprep.subr.mxu0 0.0
    %579 = vmatpush1.msra.mxu0 0.0
    %580 = vmatprep.subr.mxu0 0.0
    %581 = vmatpush1.msra.mxu0 0.0
    %582 = vmatprep.subr.mxu0 0.0
    %583 = vmatpush1.msra.mxu0 0.0
    %584 = vmatprep.subr.mxu0 0.0
    %585 = vmatpush1.msra.mxu0 0.0
    %586 = vmatprep.mubr.f32.mxu0 0.0
    %587 = vmatmul.mubr.f32.gmra.mrb[0].mxu0 %v444
    %v588 = vpop.f32.mrb[0].mxu0
    %v589 = vadd.f32 0.0, %v588
    %v590 = vpop.f32.mrb[0].mxu0
    %591 = vdwg.mxu0
    %v592 = vadd.f32 %v448, %v518
    %v593 = vxor.u32 %v592, 2147483648
    %v594 = vmul.f32 %v593, 1.442695
    %v595 = vpow.pop %v594
    %v596 = vadd.f32 %v595, 1.0
    %v597 = vrcp.pop %v596
    %v598 = vmul.f32 1.0, %v597
    %v599 = vadd.f32 %v449, %v520
    %v600 = vxor.u32 %v599, 2147483648
    %v601 = vmul.f32 %v600, 1.442695
    %v602 = vpow.pop %v601
    %v603 = vadd.f32 %v602, 1.0
    %v604 = vrcp.pop %v603
    %v605 = vmul.f32 1.0, %v604
    %v606 = vadd.f32 %v589, %v267
    %v607 = vmul.f32 %v598, %v606
    %v608 = vadd.f32 %v450, %v607
    %v609 = vtanh.pop %v608
    %v610 = vsub.f32 1.0, %v605
    %v611 = vmul.f32 %v610, %v609
    %v612 = vmul.f32 %v605, %v444
    %v613 = vadd.f32 %v611, %v612
    %s614 = scalar_lea.vmem [#allocation3], 16
    %615 = vst [vmem:[%s614] sm:$0xff] %v613
    %s616 = scalar_lea.vmem [#allocation5], 72
    %v617 = vld [vmem:[%s616] sm:$0xff]
    %v618 = vld [vmem:[%s616 + $0x8] sm:$0xff]
    %v619 = vld [vmem:[%s616 + $0x10] sm:$0xff]
    %620 = vmatprep.subr.mxu0 %v56
    %621 = vmatpush1.msra.mxu0 %v55
    %622 = vmatprep.subr.mxu0 %v59
    %623 = vmatpush1.msra.mxu0 %v58
    %624 = vmatprep.subr.mxu0 %v62
    %625 = vmatpush1.msra.mxu0 %v61
    %626 = vmatprep.subr.mxu0 %v65
    %627 = vmatpush1.msra.mxu0 %v64
    %628 = vmatprep.subr.mxu0 %v68
    %629 = vmatpush1.msra.mxu0 %v67
    %630 = vmatprep.subr.mxu0 %v71
    %631 = vmatpush1.msra.mxu0 %v70
    %632 = vmatprep.subr.mxu0 %v74
    %633 = vmatpush1.msra.mxu0 %v73
    %634 = vmatprep.subr.mxu0 %v77
    %635 = vmatpush1.msra.mxu0 %v76
    %636 = vmatprep.subr.mxu0 %v80
    %637 = vmatpush1.msra.mxu0 %v79
    %638 = vmatprep.subr.mxu0 %v83
    %639 = vmatpush1.msra.mxu0 %v82
    %640 = vmatprep.subr.mxu0 %v86
    %641 = vmatpush1.msra.mxu0 %v85
    %642 = vmatprep.subr.mxu0 %v89
    %643 = vmatpush1.msra.mxu0 %v88
    %644 = vmatprep.subr.mxu0 %v92
    %645 = vmatpush1.msra.mxu0 %v91
    %646 = vmatprep.subr.mxu0 %v95
    %647 = vmatpush1.msra.mxu0 %v94
    %648 = vmatprep.subr.mxu0 %v98
    %649 = vmatpush1.msra.mxu0 %v97
    %650 = vmatprep.subr.mxu0 %v101
    %651 = vmatpush1.msra.mxu0 %v100
    %652 = vmatprep.subr.mxu0 0.0
    %653 = vmatpush1.msra.mxu0 0.0
    %654 = vmatprep.subr.mxu0 0.0
    %655 = vmatpush1.msra.mxu0 0.0
    %656 = vmatprep.subr.mxu0 0.0
    %657 = vmatpush1.msra.mxu0 0.0
    %658 = vmatprep.subr.mxu0 0.0
    %659 = vmatpush1.msra.mxu0 0.0
    %660 = vmatprep.subr.mxu0 0.0
    %661 = vmatpush1.msra.mxu0 0.0
    %662 = vmatprep.subr.mxu0 0.0
    %663 = vmatpush1.msra.mxu0 0.0
    %664 = vmatprep.subr.mxu0 0.0
    %665 = vmatpush1.msra.mxu0 0.0
    %666 = vmatprep.subr.mxu0 0.0
    %667 = vmatpush1.msra.mxu0 0.0
    %668 = vmatprep.subr.mxu0 0.0
    %669 = vmatpush1.msra.mxu0 0.0
    %670 = vmatprep.subr.mxu0 0.0
    %671 = vmatpush1.msra.mxu0 0.0
    %672 = vmatprep.subr.mxu0 0.0
    %673 = vmatpush1.msra.mxu0 0.0
    %674 = vmatprep.subr.mxu0 0.0
    %675 = vmatpush1.msra.mxu0 0.0
    %676 = vmatprep.subr.mxu0 0.0
    %677 = vmatpush1.msra.mxu0 0.0
    %678 = vmatprep.subr.mxu0 0.0
    %679 = vmatpush1.msra.mxu0 0.0
    %680 = vmatprep.subr.mxu0 0.0
    %681 = vmatpush1.msra.mxu0 0.0
    %682 = vmatprep.subr.mxu0 0.0
    %683 = vmatpush1.msra.mxu0 0.0
    %684 = vmatprep.mubr.f32.mxu0 0.0
    %685 = vmatmul.mubr.f32.gmra.mrb[0].mxu0 %v613
    %v686 = vpop.f32.mrb[0].mxu0
    %v687 = vadd.f32 0.0, %v686
    %v688 = vpop.f32.mrb[0].mxu0
    %v689 = vadd.f32 0.0, %v688
    %690 = vdwg.mxu0
    %691 = vmatprep.subr.mxu0 0.0
    %692 = vmatpush1.msra.mxu0 %v57
    %693 = vmatprep.subr.mxu0 0.0
    %694 = vmatpush1.msra.mxu0 %v60
    %695 = vmatprep.subr.mxu0 0.0
    %696 = vmatpush1.msra.mxu0 %v63
    %697 = vmatprep.subr.mxu0 0.0
    %698 = vmatpush1.msra.mxu0 %v66
    %699 = vmatprep.subr.mxu0 0.0
    %700 = vmatpush1.msra.mxu0 %v69
    %701 = vmatprep.subr.mxu0 0.0
    %702 = vmatpush1.msra.mxu0 %v72
    %703 = vmatprep.subr.mxu0 0.0
    %704 = vmatpush1.msra.mxu0 %v75
    %705 = vmatprep.subr.mxu0 0.0
    %706 = vmatpush1.msra.mxu0 %v78
    %707 = vmatprep.subr.mxu0 0.0
    %708 = vmatpush1.msra.mxu0 %v81
    %709 = vmatprep.subr.mxu0 0.0
    %710 = vmatpush1.msra.mxu0 %v84
    %711 = vmatprep.subr.mxu0 0.0
    %712 = vmatpush1.msra.mxu0 %v87
    %713 = vmatprep.subr.mxu0 0.0
    %714 = vmatpush1.msra.mxu0 %v90
    %715 = vmatprep.subr.mxu0 0.0
    %716 = vmatpush1.msra.mxu0 %v93
    %717 = vmatprep.subr.mxu0 0.0
    %718 = vmatpush1.msra.mxu0 %v96
    %719 = vmatprep.subr.mxu0 0.0
    %720 = vmatpush1.msra.mxu0 %v99
    %721 = vmatprep.subr.mxu0 0.0
    %722 = vmatpush1.msra.mxu0 %v102
    %723 = vmatprep.subr.mxu0 0.0
    %724 = vmatpush1.msra.mxu0 0.0
    %725 = vmatprep.subr.mxu0 0.0
    %726 = vmatpush1.msra.mxu0 0.0
    %727 = vmatprep.subr.mxu0 0.0
    %728 = vmatpush1.msra.mxu0 0.0
    %729 = vmatprep.subr.mxu0 0.0
    %730 = vmatpush1.msra.mxu0 0.0
    %731 = vmatprep.subr.mxu0 0.0
    %732 = vmatpush1.msra.mxu0 0.0
    %733 = vmatprep.subr.mxu0 0.0
    %734 = vmatpush1.msra.mxu0 0.0
    %735 = vmatprep.subr.mxu0 0.0
    %736 = vmatpush1.msra.mxu0 0.0
    %737 = vmatprep.subr.mxu0 0.0
    %738 = vmatpush1.msra.mxu0 0.0
    %739 = vmatprep.subr.mxu0 0.0
    %740 = vmatpush1.msra.mxu0 0.0
    %741 = vmatprep.subr.mxu0 0.0
    %742 = vmatpush1.msra.mxu0 0.0
    %743 = vmatprep.subr.mxu0 0.0
    %744 = vmatpush1.msra.mxu0 0.0
    %745 = vmatprep.subr.mxu0 0.0
    %746 = vmatpush1.msra.mxu0 0.0
    %747 = vmatprep.subr.mxu0 0.0
    %748 = vmatpush1.msra.mxu0 0.0
    %749 = vmatprep.subr.mxu0 0.0
    %750 = vmatpush1.msra.mxu0 0.0
    %751 = vmatprep.subr.mxu0 0.0
    %752 = vmatpush1.msra.mxu0 0.0
    %753 = vmatprep.subr.mxu0 0.0
    %754 = vmatpush1.msra.mxu0 0.0
    %755 = vmatprep.mubr.f32.mxu0 0.0
    %756 = vmatmul.mubr.f32.gmra.mrb[0].mxu0 %v613
    %v757 = vpop.f32.mrb[0].mxu0
    %v758 = vadd.f32 0.0, %v757
    %v759 = vpop.f32.mrb[0].mxu0
    %760 = vdwg.mxu0
    %v761 = vadd.f32 %v617, %v687
    %v762 = vxor.u32 %v761, 2147483648
    %v763 = vmul.f32 %v762, 1.442695
    %v764 = vpow.pop %v763
    %v765 = vadd.f32 %v764, 1.0
    %v766 = vrcp.pop %v765
    %v767 = vmul.f32 1.0, %v766
    %v768 = vadd.f32 %v618, %v689
    %v769 = vxor.u32 %v768, 2147483648
    %v770 = vmul.f32 %v769, 1.442695
    %v771 = vpow.pop %v770
    %v772 = vadd.f32 %v771, 1.0
    %v773 = vrcp.pop %v772
    %v774 = vmul.f32 1.0, %v773
    %v775 = vadd.f32 %v758, %v267
    %v776 = vmul.f32 %v767, %v775
    %v777 = vadd.f32 %v619, %v776
    %v778 = vtanh.pop %v777
    %v779 = vsub.f32 1.0, %v774
    %v780 = vmul.f32 %v779, %v778
    %v781 = vmul.f32 %v774, %v613
    %v782 = vadd.f32 %v780, %v781
    %s783 = scalar_lea.vmem [#allocation3], 24
    %784 = vst [vmem:[%s783] sm:$0xff] %v782
    %s785 = scalar_lea.vmem [#allocation5], 96
    %v786 = vld [vmem:[%s785] sm:$0xff]
    %v787 = vld [vmem:[%s785 + $0x8] sm:$0xff]
    %v788 = vld [vmem:[%s785 + $0x10] sm:$0xff]
    %789 = vmatprep.subr.mxu0 %v56
    %790 = vmatpush1.msra.mxu0 %v55
    %791 = vmatprep.subr.mxu0 %v59
    %792 = vmatpush1.msra.mxu0 %v58
    %793 = vmatprep.subr.mxu0 %v62
    %794 = vmatpush1.msra.mxu0 %v61
    %795 = vmatprep.subr.mxu0 %v65
    %796 = vmatpush1.msra.mxu0 %v64
    %797 = vmatprep.subr.mxu0 %v68
    %798 = vmatpush1.msra.mxu0 %v67
    %799 = vmatprep.subr.mxu0 %v71
    %800 = vmatpush1.msra.mxu0 %v70
    %801 = vmatprep.subr.mxu0 %v74
    %802 = vmatpush1.msra.mxu0 %v73
    %803 = vmatprep.subr.mxu0 %v77
    %804 = vmatpush1.msra.mxu0 %v76
    %805 = vmatprep.subr.mxu0 %v80
    %806 = vmatpush1.msra.mxu0 %v79
    %807 = vmatprep.subr.mxu0 %v83
    %808 = vmatpush1.msra.mxu0 %v82
    %809 = vmatprep.subr.mxu0 %v86
    %810 = vmatpush1.msra.mxu0 %v85
    %811 = vmatprep.subr.mxu0 %v89
    %812 = vmatpush1.msra.mxu0 %v88
    %813 = vmatprep.subr.mxu0 %v92
    %814 = vmatpush1.msra.mxu0 %v91
    %815 = vmatprep.subr.mxu0 %v95
    %816 = vmatpush1.msra.mxu0 %v94
    %817 = vmatprep.subr.mxu0 %v98
    %818 = vmatpush1.msra.mxu0 %v97
    %819 = vmatprep.subr.mxu0 %v101
    %820 = vmatpush1.msra.mxu0 %v100
    %821 = vmatprep.subr.mxu0 0.0
    %822 = vmatpush1.msra.mxu0 0.0
    %823 = vmatprep.subr.mxu0 0.0
    %824 = vmatpush1.msra.mxu0 0.0
    %825 = vmatprep.subr.mxu0 0.0
    %826 = vmatpush1.msra.mxu0 0.0
    %827 = vmatprep.subr.mxu0 0.0
    %828 = vmatpush1.msra.mxu0 0.0
    %829 = vmatprep.subr.mxu0 0.0
    %830 = vmatpush1.msra.mxu0 0.0
    %831 = vmatprep.subr.mxu0 0.0
    %832 = vmatpush1.msra.mxu0 0.0
    %833 = vmatprep.subr.mxu0 0.0
    %834 = vmatpush1.msra.mxu0 0.0
    %835 = vmatprep.subr.mxu0 0.0
    %836 = vmatpush1.msra.mxu0 0.0
    %837 = vmatprep.subr.mxu0 0.0
    %838 = vmatpush1.msra.mxu0 0.0
    %839 = vmatprep.subr.mxu0 0.0
    %840 = vmatpush1.msra.mxu0 0.0
    %841 = vmatprep.subr.mxu0 0.0
    %842 = vmatpush1.msra.mxu0 0.0
    %843 = vmatprep.subr.mxu0 0.0
    %844 = vmatpush1.msra.mxu0 0.0
    %845 = vmatprep.subr.mxu0 0.0
    %846 = vmatpush1.msra.mxu0 0.0
    %847 = vmatprep.subr.mxu0 0.0
    %848 = vmatpush1.msra.mxu0 0.0
    %849 = vmatprep.subr.mxu0 0.0
    %850 = vmatpush1.msra.mxu0 0.0
    %851 = vmatprep.subr.mxu0 0.0
    %852 = vmatpush1.msra.mxu0 0.0
    %853 = vmatprep.mubr.f32.mxu0 0.0
    %854 = vmatmul.mubr.f32.gmra.mrb[0].mxu0 %v782
    %v855 = vpop.f32.mrb[0].mxu0
    %v856 = vadd.f32 0.0, %v855
    %v857 = vpop.f32.mrb[0].mxu0
    %v858 = vadd.f32 0.0, %v857
    %859 = vdwg.mxu0
    %860 = vmatprep.subr.mxu0 0.0
    %861 = vmatpush1.msra.mxu0 %v57
    %862 = vmatprep.subr.mxu0 0.0
    %863 = vmatpush1.msra.mxu0 %v60
    %864 = vmatprep.subr.mxu0 0.0
    %865 = vmatpush1.msra.mxu0 %v63
    %866 = vmatprep.subr.mxu0 0.0
    %867 = vmatpush1.msra.mxu0 %v66
    %868 = vmatprep.subr.mxu0 0.0
    %869 = vmatpush1.msra.mxu0 %v69
    %870 = vmatprep.subr.mxu0 0.0
    %871 = vmatpush1.msra.mxu0 %v72
    %872 = vmatprep.subr.mxu0 0.0
    %873 = vmatpush1.msra.mxu0 %v75
    %874 = vmatprep.subr.mxu0 0.0
    %875 = vmatpush1.msra.mxu0 %v78
    %876 = vmatprep.subr.mxu0 0.0
    %877 = vmatpush1.msra.mxu0 %v81
    %878 = vmatprep.subr.mxu0 0.0
    %879 = vmatpush1.msra.mxu0 %v84
    %880 = vmatprep.subr.mxu0 0.0
    %881 = vmatpush1.msra.mxu0 %v87
    %882 = vmatprep.subr.mxu0 0.0
    %883 = vmatpush1.msra.mxu0 %v90
    %884 = vmatprep.subr.mxu0 0.0
    %885 = vmatpush1.msra.mxu0 %v93
    %886 = vmatprep.subr.mxu0 0.0
    %887 = vmatpush1.msra.mxu0 %v96
    %888 = vmatprep.subr.mxu0 0.0
    %889 = vmatpush1.msra.mxu0 %v99
    %890 = vmatprep.subr.mxu0 0.0
    %891 = vmatpush1.msra.mxu0 %v102
    %892 = vmatprep.subr.mxu0 0.0
    %893 = vmatpush1.msra.mxu0 0.0
    %894 = vmatprep.subr.mxu0 0.0
    %895 = vmatpush1.msra.mxu0 0.0
    %896 = vmatprep.subr.mxu0 0.0
    %897 = vmatpush1.msra.mxu0 0.0
    %898 = vmatprep.subr.mxu0 0.0
    %899 = vmatpush1.msra.mxu0 0.0
    %900 = vmatprep.subr.mxu0 0.0
    %901 = vmatpush1.msra.mxu0 0.0
    %902 = vmatprep.subr.mxu0 0.0
    %903 = vmatpush1.msra.mxu0 0.0
    %904 = vmatprep.subr.mxu0 0.0
    %905 = vmatpush1.msra.mxu0 0.0
    %906 = vmatprep.subr.mxu0 0.0
    %907 = vmatpush1.msra.mxu0 0.0
    %908 = vmatprep.subr.mxu0 0.0
    %909 = vmatpush1.msra.mxu0 0.0
    %910 = vmatprep.subr.mxu0 0.0
    %911 = vmatpush1.msra.mxu0 0.0
    %912 = vmatprep.subr.mxu0 0.0
    %913 = vmatpush1.msra.mxu0 0.0
    %914 = vmatprep.subr.mxu0 0.0
    %915 = vmatpush1.msra.mxu0 0.0
    %916 = vmatprep.subr.mxu0 0.0
    %917 = vmatpush1.msra.mxu0 0.0
    %918 = vmatprep.subr.mxu0 0.0
    %919 = vmatpush1.msra.mxu0 0.0
    %920 = vmatprep.subr.mxu0 0.0
    %921 = vmatpush1.msra.mxu0 0.0
    %922 = vmatprep.subr.mxu0 0.0
    %923 = vmatpush1.msra.mxu0 0.0
    %924 = vmatprep.mubr.f32.mxu0 0.0
    %925 = vmatmul.mubr.f32.gmra.mrb[0].mxu0 %v782
    %v926 = vpop.f32.mrb[0].mxu0
    %v927 = vadd.f32 0.0, %v926
    %v928 = vpop.f32.mrb[0].mxu0
    %929 = vdwg.mxu0
    %v930 = vadd.f32 %v786, %v856
    %v931 = vxor.u32 %v930, 2147483648
    %v932 = vmul.f32 %v931, 1.442695
    %v933 = vpow.pop %v932
    %v934 = vadd.f32 %v933, 1.0
    %v935 = vrcp.pop %v934
    %v936 = vmul.f32 1.0, %v935
    %v937 = vadd.f32 %v787, %v858
    %v938 = vxor.u32 %v937, 2147483648
    %v939 = vmul.f32 %v938, 1.442695
    %v940 = vpow.pop %v939
    %v941 = vadd.f32 %v940, 1.0
    %v942 = vrcp.pop %v941
    %v943 = vmul.f32 1.0, %v942
    %v944 = vadd.f32 %v927, %v267
    %v945 = vmul.f32 %v936, %v944
    %v946 = vadd.f32 %v788, %v945
    %v947 = vtanh.pop %v946
    %v948 = vsub.f32 1.0, %v943
    %v949 = vmul.f32 %v948, %v947
    %v950 = vmul.f32 %v943, %v782
    %v951 = vadd.f32 %v949, %v950
    %s952 = scalar_lea.vmem [#allocation3], 32
    %953 = vst [vmem:[%s952] sm:$0xff] %v951
    %s954 = scalar_lea.vmem [#allocation5], 120
    %v955 = vld [vmem:[%s954] sm:$0xff]
    %v956 = vld [vmem:[%s954 + $0x8] sm:$0xff]
    %v957 = vld [vmem:[%s954 + $0x10] sm:$0xff]
    %958 = vmatprep.subr.mxu0 %v56
    %959 = vmatpush1.msra.mxu0 %v55
    %960 = vmatprep.subr.mxu0 %v59
    %961 = vmatpush1.msra.mxu0 %v58
    %962 = vmatprep.subr.mxu0 %v62
    %963 = vmatpush1.msra.mxu0 %v61
    %964 = vmatprep.subr.mxu0 %v65
    %965 = vmatpush1.msra.mxu0 %v64
    %966 = vmatprep.subr.mxu0 %v68
    %967 = vmatpush1.msra.mxu0 %v67
    %968 = vmatprep.subr.mxu0 %v71
    %969 = vmatpush1.msra.mxu0 %v70
    %970 = vmatprep.subr.mxu0 %v74
    %971 = vmatpush1.msra.mxu0 %v73
    %972 = vmatprep.subr.mxu0 %v77
    %973 = vmatpush1.msra.mxu0 %v76
    %974 = vmatprep.subr.mxu0 %v80
    %975 = vmatpush1.msra.mxu0 %v79
    %976 = vmatprep.subr.mxu0 %v83
    %977 = vmatpush1.msra.mxu0 %v82
    %978 = vmatprep.subr.mxu0 %v86
    %979 = vmatpush1.msra.mxu0 %v85
    %980 = vmatprep.subr.mxu0 %v89
    %981 = vmatpush1.msra.mxu0 %v88
    %982 = vmatprep.subr.mxu0 %v92
    %983 = vmatpush1.msra.mxu0 %v91
    %984 = vmatprep.subr.mxu0 %v95
    %985 = vmatpush1.msra.mxu0 %v94
    %986 = vmatprep.subr.mxu0 %v98
    %987 = vmatpush1.msra.mxu0 %v97
    %988 = vmatprep.subr.mxu0 %v101
    %989 = vmatpush1.msra.mxu0 %v100
    %990 = vmatprep.subr.mxu0 0.0
    %991 = vmatpush1.msra.mxu0 0.0
    %992 = vmatprep.subr.mxu0 0.0
    %993 = vmatpush1.msra.mxu0 0.0
    %994 = vmatprep.subr.mxu0 0.0
    %995 = vmatpush1.msra.mxu0 0.0
    %996 = vmatprep.subr.mxu0 0.0
    %997 = vmatpush1.msra.mxu0 0.0
    %998 = vmatprep.subr.mxu0 0.0
    %999 = vmatpush1.msra.mxu0 0.0
    %1000 = vmatprep.subr.mxu0 0.0
    %1001 = vmatpush1.msra.mxu0 0.0
    %1002 = vmatprep.subr.mxu0 0.0
    %1003 = vmatpush1.msra.mxu0 0.0
    %1004 = vmatprep.subr.mxu0 0.0
    %1005 = vmatpush1.msra.mxu0 0.0
    %1006 = vmatprep.subr.mxu0 0.0
    %1007 = vmatpush1.msra.mxu0 0.0
    %1008 = vmatprep.subr.mxu0 0.0
    %1009 = vmatpush1.msra.mxu0 0.0
    %1010 = vmatprep.subr.mxu0 0.0
    %1011 = vmatpush1.msra.mxu0 0.0
    %1012 = vmatprep.subr.mxu0 0.0
    %1013 = vmatpush1.msra.mxu0 0.0
    %1014 = vmatprep.subr.mxu0 0.0
    %1015 = vmatpush1.msra.mxu0 0.0
    %1016 = vmatprep.subr.mxu0 0.0
    %1017 = vmatpush1.msra.mxu0 0.0
    %1018 = vmatprep.subr.mxu0 0.0
    %1019 = vmatpush1.msra.mxu0 0.0
    %1020 = vmatprep.subr.mxu0 0.0
    %1021 = vmatpush1.msra.mxu0 0.0
    %1022 = vmatprep.mubr.f32.mxu0 0.0
    %1023 = vmatmul.mubr.f32.gmra.mrb[0].mxu0 %v951
    %v1024 = vpop.f32.mrb[0].mxu0
    %v1025 = vadd.f32 0.0, %v1024
    %v1026 = vpop.f32.mrb[0].mxu0
    %v1027 = vadd.f32 0.0, %v1026
    %1028 = vdwg.mxu0
    %1029 = vmatprep.subr.mxu0 0.0
    %1030 = vmatpush1.msra.mxu0 %v57
    %1031 = vmatprep.subr.mxu0 0.0
    %1032 = vmatpush1.msra.mxu0 %v60
    %1033 = vmatprep.subr.mxu0 0.0
    %1034 = vmatpush1.msra.mxu0 %v63
    %1035 = vmatprep.subr.mxu0 0.0
    %1036 = vmatpush1.msra.mxu0 %v66
    %1037 = vmatprep.subr.mxu0 0.0
    %1038 = vmatpush1.msra.mxu0 %v69
    %1039 = vmatprep.subr.mxu0 0.0
    %1040 = vmatpush1.msra.mxu0 %v72
    %1041 = vmatprep.subr.mxu0 0.0
    %1042 = vmatpush1.msra.mxu0 %v75
    %1043 = vmatprep.subr.mxu0 0.0
    %1044 = vmatpush1.msra.mxu0 %v78
    %1045 = vmatprep.subr.mxu0 0.0
    %1046 = vmatpush1.msra.mxu0 %v81
    %1047 = vmatprep.subr.mxu0 0.0
    %1048 = vmatpush1.msra.mxu0 %v84
    %1049 = vmatprep.subr.mxu0 0.0
    %1050 = vmatpush1.msra.mxu0 %v87
    %1051 = vmatprep.subr.mxu0 0.0
    %1052 = vmatpush1.msra.mxu0 %v90
    %1053 = vmatprep.subr.mxu0 0.0
    %1054 = vmatpush1.msra.mxu0 %v93
    %1055 = vmatprep.subr.mxu0 0.0
    %1056 = vmatpush1.msra.mxu0 %v96
    %1057 = vmatprep.subr.mxu0 0.0
    %1058 = vmatpush1.msra.mxu0 %v99
    %1059 = vmatprep.subr.mxu0 0.0
    %1060 = vmatpush1.msra.mxu0 %v102
    %1061 = vmatprep.subr.mxu0 0.0
    %1062 = vmatpush1.msra.mxu0 0.0
    %1063 = vmatprep.subr.mxu0 0.0
    %1064 = vmatpush1.msra.mxu0 0.0
    %1065 = vmatprep.subr.mxu0 0.0
    %1066 = vmatpush1.msra.mxu0 0.0
    %1067 = vmatprep.subr.mxu0 0.0
    %1068 = vmatpush1.msra.mxu0 0.0
    %1069 = vmatprep.subr.mxu0 0.0
    %1070 = vmatpush1.msra.mxu0 0.0
    %1071 = vmatprep.subr.mxu0 0.0
    %1072 = vmatpush1.msra.mxu0 0.0
    %1073 = vmatprep.subr.mxu0 0.0
    %1074 = vmatpush1.msra.mxu0 0.0
    %1075 = vmatprep.subr.mxu0 0.0
    %1076 = vmatpush1.msra.mxu0 0.0
    %1077 = vmatprep.subr.mxu0 0.0
    %1078 = vmatpush1.msra.mxu0 0.0
    %1079 = vmatprep.subr.mxu0 0.0
    %1080 = vmatpush1.msra.mxu0 0.0
    %1081 = vmatprep.subr.mxu0 0.0
    %1082 = vmatpush1.msra.mxu0 0.0
    %1083 = vmatprep.subr.mxu0 0.0
    %1084 = vmatpush1.msra.mxu0 0.0
    %1085 = vmatprep.subr.mxu0 0.0
    %1086 = vmatpush1.msra.mxu0 0.0
    %1087 = vmatprep.subr.mxu0 0.0
    %1088 = vmatpush1.msra.mxu0 0.0
    %1089 = vmatprep.subr.mxu0 0.0
    %1090 = vmatpush1.msra.mxu0 0.0
    %1091 = vmatprep.subr.mxu0 0.0
    %1092 = vmatpush1.msra.mxu0 0.0
    %1093 = vmatprep.mubr.f32.mxu0 0.0
    %1094 = vmatmul.mubr.f32.gmra.mrb[0].mxu0 %v951
    %v1095 = vpop.f32.mrb[0].mxu0
    %v1096 = vadd.f32 0.0, %v1095
    %v1097 = vpop.f32.mrb[0].mxu0
    %1098 = vdwg.mxu0
    %v1099 = vadd.f32 %v955, %v1025
    %v1100 = vxor.u32 %v1099, 2147483648
    %v1101 = vmul.f32 %v1100, 1.442695
    %v1102 = vpow.pop %v1101
    %v1103 = vadd.f32 %v1102, 1.0
    %v1104 = vrcp.pop %v1103
    %v1105 = vmul.f32 1.0, %v1104
    %v1106 = vadd.f32 %v956, %v1027
    %v1107 = vxor.u32 %v1106, 2147483648
    %v1108 = vmul.f32 %v1107, 1.442695
    %v1109 = vpow.pop %v1108
    %v1110 = vadd.f32 %v1109, 1.0
    %v1111 = vrcp.pop %v1110
    %v1112 = vmul.f32 1.0, %v1111
    %v1113 = vadd.f32 %v1096, %v267
    %v1114 = vmul.f32 %v1105, %v1113
    %v1115 = vadd.f32 %v957, %v1114
    %v1116 = vtanh.pop %v1115
    %v1117 = vsub.f32 1.0, %v1112
    %v1118 = vmul.f32 %v1117, %v1116
    %v1119 = vmul.f32 %v1112, %v951
    %v1120 = vadd.f32 %v1118, %v1119
    %s1121 = scalar_lea.vmem [#allocation3], 40
    %1122 = vst [vmem:[%s1121] sm:$0xff] %v1120
    %s1123 = scalar_lea.vmem [#allocation5], 144
    %v1124 = vld [vmem:[%s1123] sm:$0xff]
    %v1125 = vld [vmem:[%s1123 + $0x8] sm:$0xff]
    %v1126 = vld [vmem:[%s1123 + $0x10] sm:$0xff]
    %1127 = vmatprep.subr.mxu0 %v56
    %1128 = vmatpush1.msra.mxu0 %v55
    %1129 = vmatprep.subr.mxu0 %v59
    %1130 = vmatpush1.msra.mxu0 %v58
    %1131 = vmatprep.subr.mxu0 %v62
    %1132 = vmatpush1.msra.mxu0 %v61
    %1133 = vmatprep.subr.mxu0 %v65
    %1134 = vmatpush1.msra.mxu0 %v64
    %1135 = vmatprep.subr.mxu0 %v68
    %1136 = vmatpush1.msra.mxu0 %v67
    %1137 = vmatprep.subr.mxu0 %v71
    %1138 = vmatpush1.msra.mxu0 %v70
    %1139 = vmatprep.subr.mxu0 %v74
    %1140 = vmatpush1.msra.mxu0 %v73
    %1141 = vmatprep.subr.mxu0 %v77
    %1142 = vmatpush1.msra.mxu0 %v76
    %1143 = vmatprep.subr.mxu0 %v80
    %1144 = vmatpush1.msra.mxu0 %v79
    %1145 = vmatprep.subr.mxu0 %v83
    %1146 = vmatpush1.msra.mxu0 %v82
    %1147 = vmatprep.subr.mxu0 %v86
    %1148 = vmatpush1.msra.mxu0 %v85
    %1149 = vmatprep.subr.mxu0 %v89
    %1150 = vmatpush1.msra.mxu0 %v88
    %1151 = vmatprep.subr.mxu0 %v92
    %1152 = vmatpush1.msra.mxu0 %v91
    %1153 = vmatprep.subr.mxu0 %v95
    %1154 = vmatpush1.msra.mxu0 %v94
    %1155 = vmatprep.subr.mxu0 %v98
    %1156 = vmatpush1.msra.mxu0 %v97
    %1157 = vmatprep.subr.mxu0 %v101
    %1158 = vmatpush1.msra.mxu0 %v100
    %1159 = vmatprep.subr.mxu0 0.0
    %1160 = vmatpush1.msra.mxu0 0.0
    %1161 = vmatprep.subr.mxu0 0.0
    %1162 = vmatpush1.msra.mxu0 0.0
    %1163 = vmatprep.subr.mxu0 0.0
    %1164 = vmatpush1.msra.mxu0 0.0
    %1165 = vmatprep.subr.mxu0 0.0
    %1166 = vmatpush1.msra.mxu0 0.0
    %1167 = vmatprep.subr.mxu0 0.0
    %1168 = vmatpush1.msra.mxu0 0.0
    %1169 = vmatprep.subr.mxu0 0.0
    %1170 = vmatpush1.msra.mxu0 0.0
    %1171 = vmatprep.subr.mxu0 0.0
    %1172 = vmatpush1.msra.mxu0 0.0
    %1173 = vmatprep.subr.mxu0 0.0
    %1174 = vmatpush1.msra.mxu0 0.0
    %1175 = vmatprep.subr.mxu0 0.0
    %1176 = vmatpush1.msra.mxu0 0.0
    %1177 = vmatprep.subr.mxu0 0.0
    %1178 = vmatpush1.msra.mxu0 0.0
    %1179 = vmatprep.subr.mxu0 0.0
    %1180 = vmatpush1.msra.mxu0 0.0
    %1181 = vmatprep.subr.mxu0 0.0
    %1182 = vmatpush1.msra.mxu0 0.0
    %1183 = vmatprep.subr.mxu0 0.0
    %1184 = vmatpush1.msra.mxu0 0.0
    %1185 = vmatprep.subr.mxu0 0.0
    %1186 = vmatpush1.msra.mxu0 0.0
    %1187 = vmatprep.subr.mxu0 0.0
    %1188 = vmatpush1.msra.mxu0 0.0
    %1189 = vmatprep.subr.mxu0 0.0
    %1190 = vmatpush1.msra.mxu0 0.0
    %1191 = vmatprep.mubr.f32.mxu0 0.0
    %1192 = vmatmul.mubr.f32.gmra.mrb[0].mxu0 %v1120
    %v1193 = vpop.f32.mrb[0].mxu0
    %v1194 = vadd.f32 0.0, %v1193
    %v1195 = vpop.f32.mrb[0].mxu0
    %v1196 = vadd.f32 0.0, %v1195
    %1197 = vdwg.mxu0
    %1198 = vmatprep.subr.mxu0 0.0
    %1199 = vmatpush1.msra.mxu0 %v57
    %1200 = vmatprep.subr.mxu0 0.0
    %1201 = vmatpush1.msra.mxu0 %v60
    %1202 = vmatprep.subr.mxu0 0.0
    %1203 = vmatpush1.msra.mxu0 %v63
    %1204 = vmatprep.subr.mxu0 0.0
    %1205 = vmatpush1.msra.mxu0 %v66
    %1206 = vmatprep.subr.mxu0 0.0
    %1207 = vmatpush1.msra.mxu0 %v69
    %1208 = vmatprep.subr.mxu0 0.0
    %1209 = vmatpush1.msra.mxu0 %v72
    %1210 = vmatprep.subr.mxu0 0.0
    %1211 = vmatpush1.msra.mxu0 %v75
    %1212 = vmatprep.subr.mxu0 0.0
    %1213 = vmatpush1.msra.mxu0 %v78
    %1214 = vmatprep.subr.mxu0 0.0
    %1215 = vmatpush1.msra.mxu0 %v81
    %1216 = vmatprep.subr.mxu0 0.0
    %1217 = vmatpush1.msra.mxu0 %v84
    %1218 = vmatprep.subr.mxu0 0.0
    %1219 = vmatpush1.msra.mxu0 %v87
    %1220 = vmatprep.subr.mxu0 0.0
    %1221 = vmatpush1.msra.mxu0 %v90
    %1222 = vmatprep.subr.mxu0 0.0
    %1223 = vmatpush1.msra.mxu0 %v93
    %1224 = vmatprep.subr.mxu0 0.0
    %1225 = vmatpush1.msra.mxu0 %v96
    %1226 = vmatprep.subr.mxu0 0.0
    %1227 = vmatpush1.msra.mxu0 %v99
    %1228 = vmatprep.subr.mxu0 0.0
    %1229 = vmatpush1.msra.mxu0 %v102
    %1230 = vmatprep.subr.mxu0 0.0
    %1231 = vmatpush1.msra.mxu0 0.0
    %1232 = vmatprep.subr.mxu0 0.0
    %1233 = vmatpush1.msra.mxu0 0.0
    %1234 = vmatprep.subr.mxu0 0.0
    %1235 = vmatpush1.msra.mxu0 0.0
    %1236 = vmatprep.subr.mxu0 0.0
    %1237 = vmatpush1.msra.mxu0 0.0
    %1238 = vmatprep.subr.mxu0 0.0
    %1239 = vmatpush1.msra.mxu0 0.0
    %1240 = vmatprep.subr.mxu0 0.0
    %1241 = vmatpush1.msra.mxu0 0.0
    %1242 = vmatprep.subr.mxu0 0.0
    %1243 = vmatpush1.msra.mxu0 0.0
    %1244 = vmatprep.subr.mxu0 0.0
    %1245 = vmatpush1.msra.mxu0 0.0
    %1246 = vmatprep.subr.mxu0 0.0
    %1247 = vmatpush1.msra.mxu0 0.0
    %1248 = vmatprep.subr.mxu0 0.0
    %1249 = vmatpush1.msra.mxu0 0.0
    %1250 = vmatprep.subr.mxu0 0.0
    %1251 = vmatpush1.msra.mxu0 0.0
    %1252 = vmatprep.subr.mxu0 0.0
    %1253 = vmatpush1.msra.mxu0 0.0
    %1254 = vmatprep.subr.mxu0 0.0
    %1255 = vmatpush1.msra.mxu0 0.0
    %1256 = vmatprep.subr.mxu0 0.0
    %1257 = vmatpush1.msra.mxu0 0.0
    %1258 = vmatprep.subr.mxu0 0.0
    %1259 = vmatpush1.msra.mxu0 0.0
    %1260 = vmatprep.subr.mxu0 0.0
    %1261 = vmatpush1.msra.mxu0 0.0
    %1262 = vmatprep.mubr.f32.mxu0 0.0
    %1263 = vmatmul.mubr.f32.gmra.mrb[0].mxu0 %v1120
    %v1264 = vpop.f32.mrb[0].mxu0
    %v1265 = vadd.f32 0.0, %v1264
    %v1266 = vpop.f32.mrb[0].mxu0
    %1267 = vdwg.mxu0
    %v1268 = vadd.f32 %v1124, %v1194
    %v1269 = vxor.u32 %v1268, 2147483648
    %v1270 = vmul.f32 %v1269, 1.442695
    %v1271 = vpow.pop %v1270
    %v1272 = vadd.f32 %v1271, 1.0
    %v1273 = vrcp.pop %v1272
    %v1274 = vmul.f32 1.0, %v1273
    %v1275 = vadd.f32 %v1125, %v1196
    %v1276 = vxor.u32 %v1275, 2147483648
    %v1277 = vmul.f32 %v1276, 1.442695
    %v1278 = vpow.pop %v1277
    %v1279 = vadd.f32 %v1278, 1.0
    %v1280 = vrcp.pop %v1279
    %v1281 = vmul.f32 1.0, %v1280
    %v1282 = vadd.f32 %v1265, %v267
    %v1283 = vmul.f32 %v1274, %v1282
    %v1284 = vadd.f32 %v1126, %v1283
    %v1285 = vtanh.pop %v1284
    %v1286 = vsub.f32 1.0, %v1281
    %v1287 = vmul.f32 %v1286, %v1285
    %v1288 = vmul.f32 %v1281, %v1120
    %v1289 = vadd.f32 %v1287, %v1288
    %s1290 = scalar_lea.vmem [#allocation3], 48
    %1291 = vst [vmem:[%s1290] sm:$0xff] %v1289
    %s1292 = scalar_lea.vmem [#allocation5], 168
    %v1293 = vld [vmem:[%s1292] sm:$0xff]
    %v1294 = vld [vmem:[%s1292 + $0x8] sm:$0xff]
    %v1295 = vld [vmem:[%s1292 + $0x10] sm:$0xff]
    %1296 = vmatprep.subr.mxu0 %v56
    %1297 = vmatpush1.msra.mxu0 %v55
    %1298 = vmatprep.subr.mxu0 %v59
    %1299 = vmatpush1.msra.mxu0 %v58
    %1300 = vmatprep.subr.mxu0 %v62
    %1301 = vmatpush1.msra.mxu0 %v61
    %1302 = vmatprep.subr.mxu0 %v65
    %1303 = vmatpush1.msra.mxu0 %v64
    %1304 = vmatprep.subr.mxu0 %v68
    %1305 = vmatpush1.msra.mxu0 %v67
    %1306 = vmatprep.subr.mxu0 %v71
    %1307 = vmatpush1.msra.mxu0 %v70
    %1308 = vmatprep.subr.mxu0 %v74
    %1309 = vmatpush1.msra.mxu0 %v73
    %1310 = vmatprep.subr.mxu0 %v77
    %1311 = vmatpush1.msra.mxu0 %v76
    %1312 = vmatprep.subr.mxu0 %v80
    %1313 = vmatpush1.msra.mxu0 %v79
    %1314 = vmatprep.subr.mxu0 %v83
    %1315 = vmatpush1.msra.mxu0 %v82
    %1316 = vmatprep.subr.mxu0 %v86
    %1317 = vmatpush1.msra.mxu0 %v85
    %1318 = vmatprep.subr.mxu0 %v89
    %1319 = vmatpush1.msra.mxu0 %v88
    %1320 = vmatprep.subr.mxu0 %v92
    %1321 = vmatpush1.msra.mxu0 %v91
    %1322 = vmatprep.subr.mxu0 %v95
    %1323 = vmatpush1.msra.mxu0 %v94
    %1324 = vmatprep.subr.mxu0 %v98
    %1325 = vmatpush1.msra.mxu0 %v97
    %1326 = vmatprep.subr.mxu0 %v101
    %1327 = vmatpush1.msra.mxu0 %v100
    %1328 = vmatprep.subr.mxu0 0.0
    %1329 = vmatpush1.msra.mxu0 0.0
    %1330 = vmatprep.subr.mxu0 0.0
    %1331 = vmatpush1.msra.mxu0 0.0
    %1332 = vmatprep.subr.mxu0 0.0
    %1333 = vmatpush1.msra.mxu0 0.0
    %1334 = vmatprep.subr.mxu0 0.0
    %1335 = vmatpush1.msra.mxu0 0.0
    %1336 = vmatprep.subr.mxu0 0.0
    %1337 = vmatpush1.msra.mxu0 0.0
    %1338 = vmatprep.subr.mxu0 0.0
    %1339 = vmatpush1.msra.mxu0 0.0
    %1340 = vmatprep.subr.mxu0 0.0
    %1341 = vmatpush1.msra.mxu0 0.0
    %1342 = vmatprep.subr.mxu0 0.0
    %1343 = vmatpush1.msra.mxu0 0.0
    %1344 = vmatprep.subr.mxu0 0.0
    %1345 = vmatpush1.msra.mxu0 0.0
    %1346 = vmatprep.subr.mxu0 0.0
    %1347 = vmatpush1.msra.mxu0 0.0
    %1348 = vmatprep.subr.mxu0 0.0
    %1349 = vmatpush1.msra.mxu0 0.0
    %1350 = vmatprep.subr.mxu0 0.0
    %1351 = vmatpush1.msra.mxu0 0.0
    %1352 = vmatprep.subr.mxu0 0.0
    %1353 = vmatpush1.msra.mxu0 0.0
    %1354 = vmatprep.subr.mxu0 0.0
    %1355 = vmatpush1.msra.mxu0 0.0
    %1356 = vmatprep.subr.mxu0 0.0
    %1357 = vmatpush1.msra.mxu0 0.0
    %1358 = vmatprep.subr.mxu0 0.0
    %1359 = vmatpush1.msra.mxu0 0.0
    %1360 = vmatprep.mubr.f32.mxu0 0.0
    %1361 = vmatmul.mubr.f32.gmra.mrb[0].mxu0 %v1289
    %v1362 = vpop.f32.mrb[0].mxu0
    %v1363 = vadd.f32 0.0, %v1362
    %v1364 = vpop.f32.mrb[0].mxu0
    %v1365 = vadd.f32 0.0, %v1364
    %1366 = vdwg.mxu0
    %1367 = vmatprep.subr.mxu0 0.0
    %1368 = vmatpush1.msra.mxu0 %v57
    %1369 = vmatprep.subr.mxu0 0.0
    %1370 = vmatpush1.msra.mxu0 %v60
    %1371 = vmatprep.subr.mxu0 0.0
    %1372 = vmatpush1.msra.mxu0 %v63
    %1373 = vmatprep.subr.mxu0 0.0
    %1374 = vmatpush1.msra.mxu0 %v66
    %1375 = vmatprep.subr.mxu0 0.0
    %1376 = vmatpush1.msra.mxu0 %v69
    %1377 = vmatprep.subr.mxu0 0.0
    %1378 = vmatpush1.msra.mxu0 %v72
    %1379 = vmatprep.subr.mxu0 0.0
    %1380 = vmatpush1.msra.mxu0 %v75
    %1381 = vmatprep.subr.mxu0 0.0
    %1382 = vmatpush1.msra.mxu0 %v78
    %1383 = vmatprep.subr.mxu0 0.0
    %1384 = vmatpush1.msra.mxu0 %v81
    %1385 = vmatprep.subr.mxu0 0.0
    %1386 = vmatpush1.msra.mxu0 %v84
    %1387 = vmatprep.subr.mxu0 0.0
    %1388 = vmatpush1.msra.mxu0 %v87
    %1389 = vmatprep.subr.mxu0 0.0
    %1390 = vmatpush1.msra.mxu0 %v90
    %1391 = vmatprep.subr.mxu0 0.0
    %1392 = vmatpush1.msra.mxu0 %v93
    %1393 = vmatprep.subr.mxu0 0.0
    %1394 = vmatpush1.msra.mxu0 %v96
    %1395 = vmatprep.subr.mxu0 0.0
    %1396 = vmatpush1.msra.mxu0 %v99
    %1397 = vmatprep.subr.mxu0 0.0
    %1398 = vmatpush1.msra.mxu0 %v102
    %1399 = vmatprep.subr.mxu0 0.0
    %1400 = vmatpush1.msra.mxu0 0.0
    %1401 = vmatprep.subr.mxu0 0.0
    %1402 = vmatpush1.msra.mxu0 0.0
    %1403 = vmatprep.subr.mxu0 0.0
    %1404 = vmatpush1.msra.mxu0 0.0
    %1405 = vmatprep.subr.mxu0 0.0
    %1406 = vmatpush1.msra.mxu0 0.0
    %1407 = vmatprep.subr.mxu0 0.0
    %1408 = vmatpush1.msra.mxu0 0.0
    %1409 = vmatprep.subr.mxu0 0.0
    %1410 = vmatpush1.msra.mxu0 0.0
    %1411 = vmatprep.subr.mxu0 0.0
    %1412 = vmatpush1.msra.mxu0 0.0
    %1413 = vmatprep.subr.mxu0 0.0
    %1414 = vmatpush1.msra.mxu0 0.0
    %1415 = vmatprep.subr.mxu0 0.0
    %1416 = vmatpush1.msra.mxu0 0.0
    %1417 = vmatprep.subr.mxu0 0.0
    %1418 = vmatpush1.msra.mxu0 0.0
    %1419 = vmatprep.subr.mxu0 0.0
    %1420 = vmatpush1.msra.mxu0 0.0
    %1421 = vmatprep.subr.mxu0 0.0
    %1422 = vmatpush1.msra.mxu0 0.0
    %1423 = vmatprep.subr.mxu0 0.0
    %1424 = vmatpush1.msra.mxu0 0.0
    %1425 = vmatprep.subr.mxu0 0.0
    %1426 = vmatpush1.msra.mxu0 0.0
    %1427 = vmatprep.subr.mxu0 0.0
    %1428 = vmatpush1.msra.mxu0 0.0
    %1429 = vmatprep.subr.mxu0 0.0
    %1430 = vmatpush1.msra.mxu0 0.0
    %1431 = vmatprep.mubr.f32.mxu0 0.0
    %1432 = vmatmul.mubr.f32.gmra.mrb[0].mxu0 %v1289
    %v1433 = vpop.f32.mrb[0].mxu0
    %v1434 = vadd.f32 0.0, %v1433
    %v1435 = vpop.f32.mrb[0].mxu0
    %1436 = vdwg.mxu0
    %v1437 = vadd.f32 %v1293, %v1363
    %v1438 = vxor.u32 %v1437, 2147483648
    %v1439 = vmul.f32 %v1438, 1.442695
    %v1440 = vpow.pop %v1439
    %v1441 = vadd.f32 %v1440, 1.0
    %v1442 = vrcp.pop %v1441
    %v1443 = vmul.f32 1.0, %v1442
    %v1444 = vadd.f32 %v1294, %v1365
    %v1445 = vxor.u32 %v1444, 2147483648
    %v1446 = vmul.f32 %v1445, 1.442695
    %v1447 = vpow.pop %v1446
    %v1448 = vadd.f32 %v1447, 1.0
    %v1449 = vrcp.pop %v1448
    %v1450 = vmul.f32 1.0, %v1449
    %v1451 = vadd.f32 %v1434, %v267
    %v1452 = vmul.f32 %v1443, %v1451
    %v1453 = vadd.f32 %v1295, %v1452
    %v1454 = vtanh.pop %v1453
    %v1455 = vsub.f32 1.0, %v1450
    %v1456 = vmul.f32 %v1455, %v1454
    %v1457 = vmul.f32 %v1450, %v1289
    %v1458 = vadd.f32 %v1456, %v1457
    %s1459 = scalar_lea.vmem [#allocation3], 56
    %1460 = vst [vmem:[%s1459] sm:$0xff] %v1458
    %1461 = vst [vmem:[#allocation2] sm:$0xff] %v1458
    %v1462 = vld [vmem:[%s3] sm:$0x1]
    %s1463 = sld [smem:[#allocation4]]
    %v1464 = vld [vmem:[#allocation3] sm:$0xff]
    %v1465 = vld [vmem:[#allocation3 + $0x8] sm:$0xff]
    %v1466 = vld [vmem:[#allocation3 + $0x10] sm:$0xff]
    %v1467 = vld [vmem:[#allocation3 + $0x18] sm:$0xff]
    %v1468 = vld [vmem:[#allocation3 + $0x20] sm:$0xff]
    %v1469 = vld [vmem:[#allocation3 + $0x28] sm:$0xff]
    %v1470 = vld [vmem:[#allocation3 + $0x30] sm:$0xff]
    %v1471 = vld [vmem:[#allocation3 + $0x38] sm:$0xff]
    %v1473 = vlaneseq
    %v1474 = vshrl.u32 %v1473, 7
    %v1475 = vsub.s32 0, %v1474
    %v1476 = vrot.slane %v1462, %v1475
    %v1478 = vmul.f32 %v1464, %v1476
    %v1479 = vmul.f32 %v1465, %v1476
    %v1480 = vmul.f32 %v1466, %v1476
    %v1481 = vmul.f32 %v1467, %v1476
    %v1482 = vmul.f32 %v1468, %v1476
    %v1483 = vmul.f32 %v1469, %v1476
    %v1484 = vmul.f32 %v1470, %v1476
    %v1485 = vmul.f32 %v1471, %v1476
    %1486 = vadd.xlane.f32.xlu0 %v1478
    %v1487 = vpop.xlane.xlu0 %1486
    %1488 = vadd.xlane.f32.xlu0 %v1479
    %v1489 = vpop.xlane.xlu0 %1488
    %1490 = vadd.xlane.f32.xlu0 %v1480
    %v1491 = vpop.xlane.xlu0 %1490
    %1492 = vadd.xlane.f32.xlu0 %v1481
    %v1493 = vpop.xlane.xlu0 %1492
    %1494 = vadd.xlane.f32.xlu0 %v1482
    %v1495 = vpop.xlane.xlu0 %1494
    %1496 = vadd.xlane.f32.xlu0 %v1483
    %v1497 = vpop.xlane.xlu0 %1496
    %1498 = vadd.xlane.f32.xlu0 %v1484
    %v1499 = vpop.xlane.xlu0 %1498
    %1500 = vadd.xlane.f32.xlu0 %v1485
    %v1501 = vpop.xlane.xlu0 %1500
    %v1502 = vstv %s1463
    %v1503 = vadd.f32 %v1487, %v1502
    %v1504 = vadd.f32 %v1489, %v1502
    %v1505 = vadd.f32 %v1491, %v1502
    %v1506 = vadd.f32 %v1493, %v1502
    %v1507 = vadd.f32 %v1495, %v1502
    %v1508 = vadd.f32 %v1497, %v1502
    %v1509 = vadd.f32 %v1499, %v1502
    %v1510 = vadd.f32 %v1501, %v1502
    %v1511 = vxor.u32 %v1503, 2147483648
    %v1512 = vxor.u32 %v1504, 2147483648
    %v1513 = vxor.u32 %v1505, 2147483648
    %v1514 = vxor.u32 %v1506, 2147483648
    %v1515 = vxor.u32 %v1507, 2147483648
    %v1516 = vxor.u32 %v1508, 2147483648
    %v1517 = vxor.u32 %v1509, 2147483648
    %v1518 = vxor.u32 %v1510, 2147483648
    %v1519 = vmul.f32 %v1511, 1.442695
    %v1520 = vpow.pop %v1519
    %v1521 = vmul.f32 %v1512, 1.442695
    %v1522 = vpow.pop %v1521
    %v1523 = vmul.f32 %v1513, 1.442695
    %v1524 = vpow.pop %v1523
    %v1525 = vmul.f32 %v1514, 1.442695
    %v1526 = vpow.pop %v1525
    %v1527 = vmul.f32 %v1515, 1.442695
    %v1528 = vpow.pop %v1527
    %v1529 = vmul.f32 %v1516, 1.442695
    %v1530 = vpow.pop %v1529
    %v1531 = vmul.f32 %v1517, 1.442695
    %v1532 = vpow.pop %v1531
    %v1533 = vmul.f32 %v1518, 1.442695
    %v1534 = vpow.pop %v1533
    %v1535 = vadd.f32 %v1520, 1.0
    %v1536 = vadd.f32 %v1522, 1.0
    %v1537 = vadd.f32 %v1524, 1.0
    %v1538 = vadd.f32 %v1526, 1.0
    %v1539 = vadd.f32 %v1528, 1.0
    %v1540 = vadd.f32 %v1530, 1.0
    %v1541 = vadd.f32 %v1532, 1.0
    %v1542 = vadd.f32 %v1534, 1.0
    %v1543 = vrcp.pop %v1535
    %v1544 = vmul.f32 1.0, %v1543
    %v1545 = vrcp.pop %v1536
    %v1546 = vmul.f32 1.0, %v1545
    %v1547 = vrcp.pop %v1537
    %v1548 = vmul.f32 1.0, %v1547
    %v1549 = vrcp.pop %v1538
    %v1550 = vmul.f32 1.0, %v1549
    %v1551 = vrcp.pop %v1539
    %v1552 = vmul.f32 1.0, %v1551
    %v1553 = vrcp.pop %v1540
    %v1554 = vmul.f32 1.0, %v1553
    %v1555 = vrcp.pop %v1541
    %v1556 = vmul.f32 1.0, %v1555
    %v1557 = vrcp.pop %v1542
    %v1558 = vmul.f32 1.0, %v1557
    %v1567 = vlaneseq
    %v1568 = vand.u32 %v1567, 127
    %v1569 = vlaneseq
    %v1570 = vshrl.u32 %v1569, 7
    %v1571 = vsub.s32 %v1568, %v1570
    %v1572 = vrot.slane %v1544, %v1571
    %v1573 = vlaneseq
    %v1574 = vshrl.u32 %v1573, 7
    %v1575 = vsub.s32 %v1568, %v1574
    %v1576 = vrot.slane %v1546, %v1575
    %v1577 = vlaneseq
    %v1578 = vshrl.u32 %v1577, 7
    %v1579 = vsub.s32 %v1568, %v1578
    %v1580 = vrot.slane %v1548, %v1579
    %v1581 = vlaneseq
    %v1582 = vshrl.u32 %v1581, 7
    %v1583 = vsub.s32 %v1568, %v1582
    %v1584 = vrot.slane %v1550, %v1583
    %v1585 = vlaneseq
    %v1586 = vshrl.u32 %v1585, 7
    %v1587 = vsub.s32 %v1568, %v1586
    %v1588 = vrot.slane %v1552, %v1587
    %v1589 = vlaneseq
    %v1590 = vshrl.u32 %v1589, 7
    %v1591 = vsub.s32 %v1568, %v1590
    %v1592 = vrot.slane %v1554, %v1591
    %v1593 = vlaneseq
    %v1594 = vshrl.u32 %v1593, 7
    %v1595 = vsub.s32 %v1568, %v1594
    %v1596 = vrot.slane %v1556, %v1595
    %v1597 = vlaneseq
    %v1598 = vshrl.u32 %v1597, 7
    %v1599 = vsub.s32 %v1568, %v1598
    %v1600 = vrot.slane %v1558, %v1599
    %vm1601 = vcmask 1041409
    %v1602 = vsel %vm1601, %v1576, %v1572
    %vm1603 = vcmask 1042434
    %v1604 = vsel %vm1603, %v1580, %v1602
    %vm1605 = vcmask 1043459
    %v1606 = vsel %vm1605, %v1584, %v1604
    %vm1607 = vcmask 1044484
    %v1608 = vsel %vm1607, %v1588, %v1606
    %vm1609 = vcmask 1045509
    %v1610 = vsel %vm1609, %v1592, %v1608
    %vm1611 = vcmask 1046534
    %v1612 = vsel %vm1611, %v1596, %v1610
    %vm1613 = vcmask 1047559
    %v1614 = vsel %vm1613, %v1600, %v1612
    %vm1616 = vcmask 64512
    %1617 = vst.msk [vmem:[#allocation10] sm:$0xff] %vm1616, %v1614
    // Predicated region
    $region34: #{tpu_custom_call.1} parent=1 // pred_check
      _
    $region35: #{tpu_custom_call.1} parent=1 // pred_check_branch
      %1619 = sbr.rel (0) target = $region37
    $region36: #{tpu_custom_call.1} parent=1 // pred_region
      %s1621 = ssub.s32 128, 128
      %1622 = vsyncadd [#allocation7], %s1621
      %s1624 = sshll.u32 [#allocation10], 4
      %s1625 = int_to_ptr.vmem [resolvable:$true] %s1624
      %1627 = dma.vmem_to_hbm [thread:$0]  %s1625, 128, %s5, [#allocation7]
    $region37: #{tpu_custom_call.1} parent=1 // pred_fallthru
      _
    // Predicated region
    $region38: #{tpu_custom_call.1} parent=1 // pred_check
      _
    $region39: #{tpu_custom_call.1} parent=1 // pred_check_branch
      %1629 = sbr.rel (0) target = $region41
    $region40: #{tpu_custom_call.1} parent=1 // pred_region
      %1630 = dma.done [#allocation7], 128
    $region41: #{tpu_custom_call.1} parent=1 // pred_fallthru
      _
    %1631 = vsyncpa [#allocation6], 1
    %1632 = vsyncpa [#allocation9], 1
    %1633 = vsyncpa [#allocation7], 1

</llo_original>
